<compile_context>
chip_gen: v7x
topology: tpu7x:2x2x1
jax: 0.10.0
libtpu: 0.0.40
codegen_flags: <defaults>
</compile_context>

<pallas_src>
import functools

import jax
import jax.numpy as jnp
from jax import lax
from jax.experimental import pallas as pl
from jax.experimental.pallas import tpu as pltpu


# ---------------------------------------------------------------------------
# Wrapper-side builders for the tiny fold-in matrices (all 0/1 or weights).
# ---------------------------------------------------------------------------
def _up_pad_matrix(h_in, w_in, w_stride_in, h_out, w_out):
    """0/1 matrix (h_in*w_stride_in, (h_out+3)*(w_out+2)) that folds together:
    nearest upsample (floor rule), zero pad=1 (+extra safety rows for the
    flattened-tap conv trick), row-major flatten, and dropping of the caller's
    garbage columns (input columns w >= w_in are never selected)."""
    wp = w_out + 2
    lp = (h_out + 3) * wp
    hi = (jnp.arange(h_out) * h_in) // h_out          # nearest source rows
    wi = (jnp.arange(w_out) * w_in) // w_out          # nearest source cols
    src = (hi[:, None] * w_stride_in + wi[None, :]).reshape(-1)
    dst = ((jnp.arange(h_out)[:, None] + 1) * wp
           + (jnp.arange(w_out)[None, :] + 1)).reshape(-1)
    return jnp.zeros((h_in * w_stride_in, lp), jnp.float32).at[src, dst].set(1.0)


def _valid_col_mask(h, w):
    """(1, h*(w+2)) mask: 1.0 on valid columns (w_idx < w), 0.0 on garbage."""
    wp = w + 2
    return (jnp.arange(h * wp) % wp < w).astype(jnp.float32).reshape(1, h * wp)


def _valid_col_select(h, w):
    """0/1 matrix (h*(w+2), h*w) dropping the 2 garbage columns per row."""
    wp = w + 2
    rows = (jnp.arange(h)[:, None] * wp + jnp.arange(w)[None, :]).reshape(-1)
    return jnp.zeros((h * wp, h * w), jnp.float32).at[rows, jnp.arange(h * w)].set(1.0)


def _block_diag_conv3x3(w_hwio, n):
    """(3,3,Cin,Cout) -> (n*Cout, 9*n*Cin) batch-block-diagonal im2col weight.
    Output row (b, co); input col (tap, b2, ci); nonzero iff b == b2."""
    kh, kw, cin, cout = w_hwio.shape
    w2 = jnp.transpose(w_hwio, (3, 0, 1, 2)).reshape(cout, kh * kw, cin)  # (co,t,ci)
    big = jnp.einsum("ab,ctk->actbk", jnp.eye(n, dtype=w_hwio.dtype), w2)
    return big.reshape(n * cout, kh * kw * n * cin)


def _block_diag_1x1(w_io, n):
    """(Cin, Cout) -> (n*Cout, n*Cin) batch-block-diagonal pointwise weight."""
    cin, cout = w_io.shape
    big = jnp.einsum("ab,ic->acbi", jnp.eye(n, dtype=w_io.dtype), w_io)
    return big.reshape(n * cout, n * cin)


# ---------------------------------------------------------------------------
# Single fused kernel for the whole forward pass.
#   refs = [x, A, (up, wbig, gamma, beta, mask) * num_hidden, wout, sel,
#           out, pad_scratch_0, ..., pad_scratch_{num_hidden-1}]
#   All activations live as (N*C, L) values: channels on sublanes, flattened
#   spatial on lanes (= NCHW-flat layout; no transposes at either boundary).
# ---------------------------------------------------------------------------
def _decoder_kernel(*refs, hw, counts, eps):
    num_hidden = len(hw)
    n_in = 2 + 5 * num_hidden + 2
    x_ref, a_ref = refs[0], refs[1]
    layer_refs = refs[2:2 + 5 * num_hidden]
    wout_ref, sel_ref = refs[n_in - 2], refs[n_in - 1]
    out_ref = refs[n_in]
    pad_scr = refs[n_in + 1:]

    A = a_ref[...]                       # (N*C, N*C) channel-pooling 0/1 matrix
    x = x_ref[...].astype(jnp.float32)   # running activation (N*C, L)

    for i in range(num_hidden):
        up_ref, wbig_ref, g_ref, b_ref, m_ref = layer_refs[5 * i:5 * i + 5]
        H, W = hw[i]
        Wp, M = W + 2, H * (W + 2)

        # (1) nearest upsample + zero-pad(1) + drop previous garbage columns:
        #     one MXU matmul with a precomputed 0/1 matrix.
        pad_scr[i][...] = jnp.dot(x, up_ref[...],
                                  preferred_element_type=jnp.float32)

        # (2) 3x3 conv (stride 1, pad 1, no bias) as ONE matmul: the 9 taps are
        #     lane-offset slices of the flattened padded image, stacked along
        #     sublanes (im2col, K = 9*N*C) against a block-diagonal weight.
        cols = jnp.concatenate(
            [pad_scr[i][:, kh * Wp + kw: kh * Wp + kw + M]
             for kh in range(3) for kw in range(3)], axis=0)         # (9*N*C, M)
        y = jnp.dot(wbig_ref[...], cols,
                    preferred_element_type=jnp.float32)              # (N*C, M)

        # (3) ReLU + BatchNorm2d (training-mode batch stats, biased variance,
        #     affine).  Garbage columns (w >= W) are masked out of the stats;
        #     their (finite) outputs are zeroed by the next layer's 0/1 matrix.
        z = jnp.maximum(y, 0.0)
        msk = m_ref[...]                                             # (1, M)
        cnt = float(counts[i])                                       # N*H*W
        mean = jnp.sum(jnp.dot(A, z * msk, preferred_element_type=jnp.float32),
                       axis=1, keepdims=True) / cnt                  # (N*C, 1)
        d = (z - mean) * msk
        var = jnp.sum(jnp.dot(A, d * d, preferred_element_type=jnp.float32),
                      axis=1, keepdims=True) / cnt
        x = (z - mean) * lax.rsqrt(var + eps) * g_ref[...] + b_ref[...]

    # (4) 1x1 conv (scale_out folded into the weight) then drop garbage columns
    #     -> (N*Cout, H*W) NCHW-flat output; 256-lane store is unmasked/dense.
    y = jnp.dot(wout_ref[...], x, preferred_element_type=jnp.float32)
    out_ref[...] = jnp.dot(y, sel_ref[...],
                           preferred_element_type=jnp.float32).astype(out_ref.dtype)


# ---------------------------------------------------------------------------
# Model wrapper (matches conv_model with sig=None, skips=False,
# need_lin_comb=False, need_last=False, bias=False, kernel_size=3, stride 1,
# mode='nearest', act_fun=ReLU; BatchNorm2d in training mode).
# ---------------------------------------------------------------------------
class ConvModelPallas:

    def __init__(self, num_layers, strides, num_channels, num_output_channels,
                 hidden_size, key):
        assert all(s == 1 for s in strides), "config uses stride 1"
        # TODO(synk): skips / need_lin_comb / need_last / sig branches of the
        # reference module are not exercised by this configuration.
        self.num_layers = num_layers
        self.num_channels = num_channels
        self.num_output_channels = num_output_channels
        self.hidden_size = list(hidden_size)
        keys = jax.random.split(key, num_layers)
        self.conv_w, self.bn_gamma, self.bn_beta = [], [], []
        for i in range(num_layers - 1):
            w = 0.1 * jax.random.normal(
                keys[i], (3, 3, num_channels, num_channels), jnp.float32)
            self.conv_w.append(w)
            self.bn_gamma.append(jnp.ones((num_channels,), jnp.float32))
            self.bn_beta.append(jnp.zeros((num_channels,), jnp.float32))
        self.out_w = 0.1 * jax.random.normal(
            keys[-1], (num_channels, num_output_channels), jnp.float32)
        self._fwd = jax.jit(self._forward)

    def __call__(self, x_nchw, scale_out=1.0):
        return self._fwd(x_nchw, jnp.asarray(scale_out, jnp.float32))

    def _forward(self, x_nchw, scale_out):
        N, C, H0, W0 = x_nchw.shape
        assert C == self.num_channels
        num_hidden = self.num_layers - 1
        Co = self.num_output_channels

        # NCHW -> (N*C, H*W) is a free reshape (no transpose, no copy).
        args = [x_nchw.reshape(N * C, H0 * W0).astype(jnp.float32),
                jnp.tile(jnp.eye(C, dtype=jnp.float32), (N, N))]   # channel pool
        hw, counts = [], []
        h_in, w_in, w_stride = H0, W0, W0
        for i in range(num_hidden):
            # TODO(synk): nearest index uses floor((i*in)//out); matches PyTorch
            # for the integer ratios here, re-verify for non-integer ratios.
            h = w = int(self.hidden_size[i])
            args.append(_up_pad_matrix(h_in, w_in, w_stride, h, w))
            args.append(_block_diag_conv3x3(self.conv_w[i], N))
            args.append(jnp.tile(self.bn_gamma[i], N).reshape(N * C, 1))
            args.append(jnp.tile(self.bn_beta[i], N).reshape(N * C, 1))
            args.append(_valid_col_mask(h, w))
            hw.append((h, w))
            counts.append(N * h * w)
            h_in, w_in, w_stride = h, w, w + 2
        args.append(_block_diag_1x1(self.out_w, N) * scale_out)  # fold scale_out
        args.append(_valid_col_select(hw[-1][0], hw[-1][1]))

        out_struct = jax.ShapeDtypeStruct(
            (N * Co, hw[-1][0] * hw[-1][1]), x_nchw.dtype)
        kernel = functools.partial(_decoder_kernel, hw=tuple(hw),
                                   counts=tuple(counts), eps=1e-5)
        out = pl.pallas_call(
            kernel,
            out_shape=out_struct,
            grid=(1,),
            in_specs=[pl.BlockSpec(a.shape, lambda i: (0, 0)) for a in args],
            out_specs=pl.BlockSpec(out_struct.shape, lambda i: (0, 0)),
            scratch_shapes=[pltpu.VMEM((N * C, (h + 3) * (w + 2)), jnp.float32)
                            for (h, w) in hw],
            compiler_params=pltpu.CompilerParams(
                dimension_semantics=("arbitrary",)),
        )(*args)
        return out.reshape(N, Co, hw[-1][0], hw[-1][1])   # NCHW, free reshape


# ---------------------------------------------------------------------------
# Pure-JAX reference (same math as the PyTorch module) for a sanity check.
# ---------------------------------------------------------------------------
def _reference_forward(x, conv_ws, gammas, betas, out_w, hidden_size,
                       scale_out, eps=1e-5):
    for i in range(len(conv_ws)):
        s = int(hidden_size[i])
        _, c, h, w = x.shape
        hi = (jnp.arange(s) * h) // s
        wi = (jnp.arange(s) * w) // s
        x = x[:, :, hi][:, :, :, wi]                       # nearest upsample
        x = lax.conv_general_dilated(
            x, conv_ws[i], window_strides=(1, 1), padding="SAME",
            dimension_numbers=("NCHW", "HWIO", "NCHW"))
        x = jnp.maximum(x, 0.0)
        m = jnp.mean(x, axis=(0, 2, 3), keepdims=True)
        v = jnp.mean((x - m) ** 2, axis=(0, 2, 3), keepdims=True)
        x = (x - m) * lax.rsqrt(v + eps)
        x = x * gammas[i].reshape(1, -1, 1, 1) + betas[i].reshape(1, -1, 1, 1)
    return jnp.einsum("nchw,cd->ndhw", x, out_w) * scale_out


if __name__ == "__main__":
    key = jax.random.PRNGKey(0)
    k_x, k_p = jax.random.split(key)

    # Input like the PyTorch module receives: NCHW seed tensor.
    x = jax.random.normal(k_x, (2, 4, 4, 4), jnp.float32)  # (B=2, C=4, H=4, W=4)

    model = ConvModelPallas(
        num_layers=3,
        strides=[1, 1],
        num_channels=4,
        num_output_channels=3,
        hidden_size=[8, 16],
        key=k_p,
    )

    out = jax.block_until_ready(model(x, scale_out=1.0))
    assert out.shape == (2, 3, 16, 16), out.shape
    assert bool(jnp.all(jnp.isfinite(out)))

    ref = _reference_forward(x, model.conv_w, model.bn_gamma, model.bn_beta,
                             model.out_w, model.hidden_size, 1.0)
    max_err = float(jnp.max(jnp.abs(out - ref)))
    assert max_err < 1e-3, f"mismatch vs reference: {max_err}"

    print("KERNEL_OK")
</pallas_src>

<mosaic_0001>
module attributes {stable_mosaic.version = 11 : i64} {
  func.func @_decoder_kernel(%arg0: i32, %arg1: memref<8x16xf32, #tpu.memory_space<vmem>>, %arg2: memref<8x8xf32, #tpu.memory_space<vmem>>, %arg3: memref<16x110xf32, #tpu.memory_space<vmem>>, %arg4: memref<8x72xf32, #tpu.memory_space<vmem>>, %arg5: memref<8x1xf32, #tpu.memory_space<vmem>>, %arg6: memref<8x1xf32, #tpu.memory_space<vmem>>, %arg7: memref<1x80xf32, #tpu.memory_space<vmem>>, %arg8: memref<80x342xf32, #tpu.memory_space<vmem>>, %arg9: memref<8x72xf32, #tpu.memory_space<vmem>>, %arg10: memref<8x1xf32, #tpu.memory_space<vmem>>, %arg11: memref<8x1xf32, #tpu.memory_space<vmem>>, %arg12: memref<1x288xf32, #tpu.memory_space<vmem>>, %arg13: memref<6x8xf32, #tpu.memory_space<vmem>>, %arg14: memref<288x256xf32, #tpu.memory_space<vmem>>, %arg15: memref<6x256xf32, #tpu.memory_space<vmem>>, %arg16: memref<8x110xf32, #tpu.memory_space<vmem>>, %arg17: memref<8x342xf32, #tpu.memory_space<vmem>>) attributes {dimension_semantics = [#tpu.dimension_semantics<arbitrary>], iteration_bounds = array<i64: 1>, scalar_prefetch = 0 : i64, scratch_operands = 2 : i64, tpu.core_type = #tpu.core_type<tc>, window_params = [{pipeline_mode = #tpu.pipeline_mode<synchronous>, transform_indices = @transform_0, window_bounds = array<i64: 8, 16>}, {pipeline_mode = #tpu.pipeline_mode<synchronous>, transform_indices = @transform_1, window_bounds = array<i64: 8, 8>}, {pipeline_mode = #tpu.pipeline_mode<synchronous>, transform_indices = @transform_2, window_bounds = array<i64: 16, 110>}, {pipeline_mode = #tpu.pipeline_mode<synchronous>, transform_indices = @transform_3, window_bounds = array<i64: 8, 72>}, {pipeline_mode = #tpu.pipeline_mode<synchronous>, transform_indices = @transform_4, window_bounds = array<i64: 8, 1>}, {pipeline_mode = #tpu.pipeline_mode<synchronous>, transform_indices = @transform_5, window_bounds = array<i64: 8, 1>}, {pipeline_mode = #tpu.pipeline_mode<synchronous>, transform_indices = @transform_6, window_bounds = array<i64: 1, 80>}, {pipeline_mode = #tpu.pipeline_mode<synchronous>, transform_indices = @transform_7, window_bounds = array<i64: 80, 342>}, {pipeline_mode = #tpu.pipeline_mode<synchronous>, transform_indices = @transform_8, window_bounds = array<i64: 8, 72>}, {pipeline_mode = #tpu.pipeline_mode<synchronous>, transform_indices = @transform_9, window_bounds = array<i64: 8, 1>}, {pipeline_mode = #tpu.pipeline_mode<synchronous>, transform_indices = @transform_10, window_bounds = array<i64: 8, 1>}, {pipeline_mode = #tpu.pipeline_mode<synchronous>, transform_indices = @transform_11, window_bounds = array<i64: 1, 288>}, {pipeline_mode = #tpu.pipeline_mode<synchronous>, transform_indices = @transform_12, window_bounds = array<i64: 6, 8>}, {pipeline_mode = #tpu.pipeline_mode<synchronous>, transform_indices = @transform_13, window_bounds = array<i64: 288, 256>}, {pipeline_mode = #tpu.pipeline_mode<synchronous>, transform_indices = @transform_14, window_bounds = array<i64: 6, 256>}]} {
    %c0 = arith.constant 0 : index
    %c0_0 = arith.constant 0 : index
    %0 = vector.load %arg2[%c0, %c0_0] : memref<8x8xf32, #tpu.memory_space<vmem>>, vector<8x8xf32>
    %c0_1 = arith.constant 0 : index
    %c0_2 = arith.constant 0 : index
    %1 = vector.load %arg1[%c0_1, %c0_2] : memref<8x16xf32, #tpu.memory_space<vmem>>, vector<8x16xf32>
    %c0_3 = arith.constant 0 : index
    %c0_4 = arith.constant 0 : index
    %2 = vector.load %arg3[%c0_3, %c0_4] : memref<16x110xf32, #tpu.memory_space<vmem>>, vector<16x110xf32>
    %cst = arith.constant dense<0.000000e+00> : vector<8x110xf32>
    %3 = tpu.matmul %1, %2, %cst {dimension_numbers = #tpu.dot_dimension_numbers<[1], [0], [0], [1], [0, 0, 1, 1], [], []>} : vector<8x16xf32>, vector<16x110xf32>, vector<8x110xf32> -> vector<8x110xf32>
    %c0_5 = arith.constant 0 : index
    %c0_6 = arith.constant 0 : index
    %4 = vector.load %arg16[%c0_5, %c0_6] : memref<8x110xf32, #tpu.memory_space<vmem>>, vector<8x110xf32>
    tpu.vector_store %arg16[%c0_5, %c0_6], %3 {strides = array<i32>} : memref<8x110xf32, #tpu.memory_space<vmem>>, vector<8x110xf32>,
    %c0_7 = arith.constant 0 : index
    %c0_8 = arith.constant 0 : index
    %5 = vector.load %arg16[%c0_7, %c0_8] : memref<8x110xf32, #tpu.memory_space<vmem>>, vector<8x80xf32>
    %c0_9 = arith.constant 0 : index
    %c1 = arith.constant 1 : index
    %6 = vector.load %arg16[%c0_9, %c1] : memref<8x110xf32, #tpu.memory_space<vmem>>, vector<8x80xf32>
    %c0_10 = arith.constant 0 : index
    %c2 = arith.constant 2 : index
    %7 = vector.load %arg16[%c0_10, %c2] : memref<8x110xf32, #tpu.memory_space<vmem>>, vector<8x80xf32>
    %c0_11 = arith.constant 0 : index
    %c10 = arith.constant 10 : index
    %8 = vector.load %arg16[%c0_11, %c10] : memref<8x110xf32, #tpu.memory_space<vmem>>, vector<8x80xf32>
    %c0_12 = arith.constant 0 : index
    %c11 = arith.constant 11 : index
    %9 = vector.load %arg16[%c0_12, %c11] : memref<8x110xf32, #tpu.memory_space<vmem>>, vector<8x80xf32>
    %c0_13 = arith.constant 0 : index
    %c12 = arith.constant 12 : index
    %10 = vector.load %arg16[%c0_13, %c12] : memref<8x110xf32, #tpu.memory_space<vmem>>, vector<8x80xf32>
    %c0_14 = arith.constant 0 : index
    %c20 = arith.constant 20 : index
    %11 = vector.load %arg16[%c0_14, %c20] : memref<8x110xf32, #tpu.memory_space<vmem>>, vector<8x80xf32>
    %c0_15 = arith.constant 0 : index
    %c21 = arith.constant 21 : index
    %12 = vector.load %arg16[%c0_15, %c21] : memref<8x110xf32, #tpu.memory_space<vmem>>, vector<8x80xf32>
    %c0_16 = arith.constant 0 : index
    %c22 = arith.constant 22 : index
    %13 = vector.load %arg16[%c0_16, %c22] : memref<8x110xf32, #tpu.memory_space<vmem>>, vector<8x80xf32>
    %14 = tpu.concatenate %5, %6, %7, %8, %9, %10, %11, %12, %13 in 0 : vector<8x80xf32>, vector<8x80xf32>, vector<8x80xf32>, vector<8x80xf32>, vector<8x80xf32>, vector<8x80xf32>, vector<8x80xf32>, vector<8x80xf32>, vector<8x80xf32> -> vector<72x80xf32>
    %c0_17 = arith.constant 0 : index
    %c0_18 = arith.constant 0 : index
    %15 = vector.load %arg4[%c0_17, %c0_18] : memref<8x72xf32, #tpu.memory_space<vmem>>, vector<8x72xf32>
    %cst_19 = arith.constant dense<0.000000e+00> : vector<8x80xf32>
    %16 = tpu.matmul %15, %14, %cst_19 {dimension_numbers = #tpu.dot_dimension_numbers<[1], [0], [0], [1], [0, 0, 1, 1], [], []>} : vector<8x72xf32>, vector<72x80xf32>, vector<8x80xf32> -> vector<8x80xf32>
    %cst_20 = arith.constant 0.000000e+00 : f32
    %17 = vector.broadcast %cst_20 : f32 to vector<8x80xf32>
    %18 = arith.maximumf %16, %17 : vector<8x80xf32>
    %c0_21 = arith.constant 0 : index
    %c0_22 = arith.constant 0 : index
    %19 = vector.load %arg7[%c0_21, %c0_22] : memref<1x80xf32, #tpu.memory_space<vmem>>, vector<1x80xf32>
    %20 = vector.broadcast %19 : vector<1x80xf32> to vector<8x80xf32>
    %21 = arith.mulf %18, %20 : vector<8x80xf32>
    %cst_23 = arith.constant dense<0.000000e+00> : vector<8x80xf32>
    %22 = tpu.matmul %0, %21, %cst_23 {dimension_numbers = #tpu.dot_dimension_numbers<[1], [0], [0], [1], [0, 0, 1, 1], [], []>} : vector<8x8xf32>, vector<8x80xf32>, vector<8x80xf32> -> vector<8x80xf32>
    %cst_24 = arith.constant dense<0.000000e+00> : vector<8xf32>
    %23 = vector.multi_reduction <add>, %22, %cst_24 [1] : vector<8x80xf32> to vector<8xf32>
    %24 = vector.shape_cast %23 : vector<8xf32> to vector<8x1xf32>
    %cst_25 = arith.constant 1.280000e+02 : f32
    %25 = vector.broadcast %cst_25 : f32 to vector<8x1xf32>
    %26 = arith.divf %24, %25 : vector<8x1xf32>
    %27 = vector.broadcast %26 : vector<8x1xf32> to vector<8x80xf32>
    %28 = arith.subf %18, %27 : vector<8x80xf32>
    %29 = vector.broadcast %19 : vector<1x80xf32> to vector<8x80xf32>
    %30 = arith.mulf %28, %29 : vector<8x80xf32>
    %31 = arith.mulf %30, %30 : vector<8x80xf32>
    %cst_26 = arith.constant dense<0.000000e+00> : vector<8x80xf32>
    %32 = tpu.matmul %0, %31, %cst_26 {dimension_numbers = #tpu.dot_dimension_numbers<[1], [0], [0], [1], [0, 0, 1, 1], [], []>} : vector<8x8xf32>, vector<8x80xf32>, vector<8x80xf32> -> vector<8x80xf32>
    %cst_27 = arith.constant dense<0.000000e+00> : vector<8xf32>
    %33 = vector.multi_reduction <add>, %32, %cst_27 [1] : vector<8x80xf32> to vector<8xf32>
    %34 = vector.shape_cast %33 : vector<8xf32> to vector<8x1xf32>
    %cst_28 = arith.constant 1.280000e+02 : f32
    %35 = vector.broadcast %cst_28 : f32 to vector<8x1xf32>
    %36 = arith.divf %34, %35 : vector<8x1xf32>
    %37 = vector.broadcast %26 : vector<8x1xf32> to vector<8x80xf32>
    %38 = arith.subf %18, %37 : vector<8x80xf32>
    %cst_29 = arith.constant 9.99999974E-6 : f32
    %39 = vector.broadcast %cst_29 : f32 to vector<8x1xf32>
    %40 = arith.addf %36, %39 : vector<8x1xf32>
    %41 = math.rsqrt %40 : vector<8x1xf32>
    %42 = vector.broadcast %41 : vector<8x1xf32> to vector<8x80xf32>
    %43 = arith.mulf %38, %42 : vector<8x80xf32>
    %c0_30 = arith.constant 0 : index
    %c0_31 = arith.constant 0 : index
    %44 = vector.load %arg5[%c0_30, %c0_31] : memref<8x1xf32, #tpu.memory_space<vmem>>, vector<8x1xf32>
    %45 = vector.broadcast %44 : vector<8x1xf32> to vector<8x80xf32>
    %46 = arith.mulf %43, %45 : vector<8x80xf32>
    %c0_32 = arith.constant 0 : index
    %c0_33 = arith.constant 0 : index
    %47 = vector.load %arg6[%c0_32, %c0_33] : memref<8x1xf32, #tpu.memory_space<vmem>>, vector<8x1xf32>
    %48 = vector.broadcast %47 : vector<8x1xf32> to vector<8x80xf32>
    %49 = arith.addf %46, %48 : vector<8x80xf32>
    %c0_34 = arith.constant 0 : index
    %c0_35 = arith.constant 0 : index
    %50 = vector.load %arg8[%c0_34, %c0_35] : memref<80x342xf32, #tpu.memory_space<vmem>>, vector<80x342xf32>
    %cst_36 = arith.constant dense<0.000000e+00> : vector<8x342xf32>
    %51 = tpu.matmul %49, %50, %cst_36 {dimension_numbers = #tpu.dot_dimension_numbers<[1], [0], [0], [1], [0, 0, 1, 1], [], []>} : vector<8x80xf32>, vector<80x342xf32>, vector<8x342xf32> -> vector<8x342xf32>
    %c0_37 = arith.constant 0 : index
    %c0_38 = arith.constant 0 : index
    %52 = vector.load %arg17[%c0_37, %c0_38] : memref<8x342xf32, #tpu.memory_space<vmem>>, vector<8x342xf32>
    tpu.vector_store %arg17[%c0_37, %c0_38], %51 {strides = array<i32>} : memref<8x342xf32, #tpu.memory_space<vmem>>, vector<8x342xf32>,
    %c0_39 = arith.constant 0 : index
    %c0_40 = arith.constant 0 : index
    %53 = vector.load %arg17[%c0_39, %c0_40] : memref<8x342xf32, #tpu.memory_space<vmem>>, vector<8x288xf32>
    %c0_41 = arith.constant 0 : index
    %c1_42 = arith.constant 1 : index
    %54 = vector.load %arg17[%c0_41, %c1_42] : memref<8x342xf32, #tpu.memory_space<vmem>>, vector<8x288xf32>
    %c0_43 = arith.constant 0 : index
    %c2_44 = arith.constant 2 : index
    %55 = vector.load %arg17[%c0_43, %c2_44] : memref<8x342xf32, #tpu.memory_space<vmem>>, vector<8x288xf32>
    %c0_45 = arith.constant 0 : index
    %c18 = arith.constant 18 : index
    %56 = vector.load %arg17[%c0_45, %c18] : memref<8x342xf32, #tpu.memory_space<vmem>>, vector<8x288xf32>
    %c0_46 = arith.constant 0 : index
    %c19 = arith.constant 19 : index
    %57 = vector.load %arg17[%c0_46, %c19] : memref<8x342xf32, #tpu.memory_space<vmem>>, vector<8x288xf32>
    %c0_47 = arith.constant 0 : index
    %c20_48 = arith.constant 20 : index
    %58 = vector.load %arg17[%c0_47, %c20_48] : memref<8x342xf32, #tpu.memory_space<vmem>>, vector<8x288xf32>
    %c0_49 = arith.constant 0 : index
    %c36 = arith.constant 36 : index
    %59 = vector.load %arg17[%c0_49, %c36] : memref<8x342xf32, #tpu.memory_space<vmem>>, vector<8x288xf32>
    %c0_50 = arith.constant 0 : index
    %c37 = arith.constant 37 : index
    %60 = vector.load %arg17[%c0_50, %c37] : memref<8x342xf32, #tpu.memory_space<vmem>>, vector<8x288xf32>
    %c0_51 = arith.constant 0 : index
    %c38 = arith.constant 38 : index
    %61 = vector.load %arg17[%c0_51, %c38] : memref<8x342xf32, #tpu.memory_space<vmem>>, vector<8x288xf32>
    %62 = tpu.concatenate %53, %54, %55, %56, %57, %58, %59, %60, %61 in 0 : vector<8x288xf32>, vector<8x288xf32>, vector<8x288xf32>, vector<8x288xf32>, vector<8x288xf32>, vector<8x288xf32>, vector<8x288xf32>, vector<8x288xf32>, vector<8x288xf32> -> vector<72x288xf32>
    %c0_52 = arith.constant 0 : index
    %c0_53 = arith.constant 0 : index
    %63 = vector.load %arg9[%c0_52, %c0_53] : memref<8x72xf32, #tpu.memory_space<vmem>>, vector<8x72xf32>
    %cst_54 = arith.constant dense<0.000000e+00> : vector<8x288xf32>
    %64 = tpu.matmul %63, %62, %cst_54 {dimension_numbers = #tpu.dot_dimension_numbers<[1], [0], [0], [1], [0, 0, 1, 1], [], []>} : vector<8x72xf32>, vector<72x288xf32>, vector<8x288xf32> -> vector<8x288xf32>
    %cst_55 = arith.constant 0.000000e+00 : f32
    %65 = vector.broadcast %cst_55 : f32 to vector<8x288xf32>
    %66 = arith.maximumf %64, %65 : vector<8x288xf32>
    %c0_56 = arith.constant 0 : index
    %c0_57 = arith.constant 0 : index
    %67 = vector.load %arg12[%c0_56, %c0_57] : memref<1x288xf32, #tpu.memory_space<vmem>>, vector<1x288xf32>
    %68 = vector.broadcast %67 : vector<1x288xf32> to vector<8x288xf32>
    %69 = arith.mulf %66, %68 : vector<8x288xf32>
    %cst_58 = arith.constant dense<0.000000e+00> : vector<8x288xf32>
    %70 = tpu.matmul %0, %69, %cst_58 {dimension_numbers = #tpu.dot_dimension_numbers<[1], [0], [0], [1], [0, 0, 1, 1], [], []>} : vector<8x8xf32>, vector<8x288xf32>, vector<8x288xf32> -> vector<8x288xf32>
    %cst_59 = arith.constant dense<0.000000e+00> : vector<8xf32>
    %71 = vector.multi_reduction <add>, %70, %cst_59 [1] : vector<8x288xf32> to vector<8xf32>
    %72 = vector.shape_cast %71 : vector<8xf32> to vector<8x1xf32>
    %cst_60 = arith.constant 5.120000e+02 : f32
    %73 = vector.broadcast %cst_60 : f32 to vector<8x1xf32>
    %74 = arith.divf %72, %73 : vector<8x1xf32>
    %75 = vector.broadcast %74 : vector<8x1xf32> to vector<8x288xf32>
    %76 = arith.subf %66, %75 : vector<8x288xf32>
    %77 = vector.broadcast %67 : vector<1x288xf32> to vector<8x288xf32>
    %78 = arith.mulf %76, %77 : vector<8x288xf32>
    %79 = arith.mulf %78, %78 : vector<8x288xf32>
    %cst_61 = arith.constant dense<0.000000e+00> : vector<8x288xf32>
    %80 = tpu.matmul %0, %79, %cst_61 {dimension_numbers = #tpu.dot_dimension_numbers<[1], [0], [0], [1], [0, 0, 1, 1], [], []>} : vector<8x8xf32>, vector<8x288xf32>, vector<8x288xf32> -> vector<8x288xf32>
    %cst_62 = arith.constant dense<0.000000e+00> : vector<8xf32>
    %81 = vector.multi_reduction <add>, %80, %cst_62 [1] : vector<8x288xf32> to vector<8xf32>
    %82 = vector.shape_cast %81 : vector<8xf32> to vector<8x1xf32>
    %cst_63 = arith.constant 5.120000e+02 : f32
    %83 = vector.broadcast %cst_63 : f32 to vector<8x1xf32>
    %84 = arith.divf %82, %83 : vector<8x1xf32>
    %85 = vector.broadcast %74 : vector<8x1xf32> to vector<8x288xf32>
    %86 = arith.subf %66, %85 : vector<8x288xf32>
    %cst_64 = arith.constant 9.99999974E-6 : f32
    %87 = vector.broadcast %cst_64 : f32 to vector<8x1xf32>
    %88 = arith.addf %84, %87 : vector<8x1xf32>
    %89 = math.rsqrt %88 : vector<8x1xf32>
    %90 = vector.broadcast %89 : vector<8x1xf32> to vector<8x288xf32>
    %91 = arith.mulf %86, %90 : vector<8x288xf32>
    %c0_65 = arith.constant 0 : index
    %c0_66 = arith.constant 0 : index
    %92 = vector.load %arg10[%c0_65, %c0_66] : memref<8x1xf32, #tpu.memory_space<vmem>>, vector<8x1xf32>
    %93 = vector.broadcast %92 : vector<8x1xf32> to vector<8x288xf32>
    %94 = arith.mulf %91, %93 : vector<8x288xf32>
    %c0_67 = arith.constant 0 : index
    %c0_68 = arith.constant 0 : index
    %95 = vector.load %arg11[%c0_67, %c0_68] : memref<8x1xf32, #tpu.memory_space<vmem>>, vector<8x1xf32>
    %96 = vector.broadcast %95 : vector<8x1xf32> to vector<8x288xf32>
    %97 = arith.addf %94, %96 : vector<8x288xf32>
    %c0_69 = arith.constant 0 : index
    %c0_70 = arith.constant 0 : index
    %98 = vector.load %arg13[%c0_69, %c0_70] : memref<6x8xf32, #tpu.memory_space<vmem>>, vector<6x8xf32>
    %cst_71 = arith.constant dense<0.000000e+00> : vector<6x288xf32>
    %99 = tpu.matmul %98, %97, %cst_71 {dimension_numbers = #tpu.dot_dimension_numbers<[1], [0], [0], [1], [0, 0, 1, 1], [], []>} : vector<6x8xf32>, vector<8x288xf32>, vector<6x288xf32> -> vector<6x288xf32>
    %c0_72 = arith.constant 0 : index
    %c0_73 = arith.constant 0 : index
    %100 = vector.load %arg14[%c0_72, %c0_73] : memref<288x256xf32, #tpu.memory_space<vmem>>, vector<288x256xf32>
    %cst_74 = arith.constant dense<0.000000e+00> : vector<6x256xf32>
    %101 = tpu.matmul %99, %100, %cst_74 {dimension_numbers = #tpu.dot_dimension_numbers<[1], [0], [0], [1], [0, 0, 1, 1], [], []>} : vector<6x288xf32>, vector<288x256xf32>, vector<6x256xf32> -> vector<6x256xf32>
    %c0_75 = arith.constant 0 : index
    %c0_76 = arith.constant 0 : index
    %102 = vector.load %arg15[%c0_75, %c0_76] : memref<6x256xf32, #tpu.memory_space<vmem>>, vector<6x256xf32>
    tpu.vector_store %arg15[%c0_75, %c0_76], %101 {strides = array<i32>} : memref<6x256xf32, #tpu.memory_space<vmem>>, vector<6x256xf32>,
    return
  }
  func.func @transform_0(%arg0: i32) -> (i32, i32) {
    %c0_i32 = arith.constant 0 : i32
    %c0_i32_0 = arith.constant 0 : i32
    %c0_i32_1 = arith.constant 0 : i32
    return %c0_i32, %c0_i32_0 : i32, i32
  }
  func.func @transform_1(%arg0: i32) -> (i32, i32) {
    %c0_i32 = arith.constant 0 : i32
    %c0_i32_0 = arith.constant 0 : i32
    %c0_i32_1 = arith.constant 0 : i32
    return %c0_i32, %c0_i32_0 : i32, i32
  }
  func.func @transform_2(%arg0: i32) -> (i32, i32) {
    %c0_i32 = arith.constant 0 : i32
    %c0_i32_0 = arith.constant 0 : i32
    %c0_i32_1 = arith.constant 0 : i32
    return %c0_i32, %c0_i32_0 : i32, i32
  }
  func.func @transform_3(%arg0: i32) -> (i32, i32) {
    %c0_i32 = arith.constant 0 : i32
    %c0_i32_0 = arith.constant 0 : i32
    %c0_i32_1 = arith.constant 0 : i32
    return %c0_i32, %c0_i32_0 : i32, i32
  }
  func.func @transform_4(%arg0: i32) -> (i32, i32) {
    %c0_i32 = arith.constant 0 : i32
    %c0_i32_0 = arith.constant 0 : i32
    %c0_i32_1 = arith.constant 0 : i32
    return %c0_i32, %c0_i32_0 : i32, i32
  }
  func.func @transform_5(%arg0: i32) -> (i32, i32) {
    %c0_i32 = arith.constant 0 : i32
    %c0_i32_0 = arith.constant 0 : i32
    %c0_i32_1 = arith.constant 0 : i32
    return %c0_i32, %c0_i32_0 : i32, i32
  }
  func.func @transform_6(%arg0: i32) -> (i32, i32) {
    %c0_i32 = arith.constant 0 : i32
    %c0_i32_0 = arith.constant 0 : i32
    %c0_i32_1 = arith.constant 0 : i32
    return %c0_i32, %c0_i32_0 : i32, i32
  }
  func.func @transform_7(%arg0: i32) -> (i32, i32) {
    %c0_i32 = arith.constant 0 : i32
    %c0_i32_0 = arith.constant 0 : i32
    %c0_i32_1 = arith.constant 0 : i32
    return %c0_i32, %c0_i32_0 : i32, i32
  }
  func.func @transform_8(%arg0: i32) -> (i32, i32) {
    %c0_i32 = arith.constant 0 : i32
    %c0_i32_0 = arith.constant 0 : i32
    %c0_i32_1 = arith.constant 0 : i32
    return %c0_i32, %c0_i32_0 : i32, i32
  }
  func.func @transform_9(%arg0: i32) -> (i32, i32) {
    %c0_i32 = arith.constant 0 : i32
    %c0_i32_0 = arith.constant 0 : i32
    %c0_i32_1 = arith.constant 0 : i32
    return %c0_i32, %c0_i32_0 : i32, i32
  }
  func.func @transform_10(%arg0: i32) -> (i32, i32) {
    %c0_i32 = arith.constant 0 : i32
    %c0_i32_0 = arith.constant 0 : i32
    %c0_i32_1 = arith.constant 0 : i32
    return %c0_i32, %c0_i32_0 : i32, i32
  }
  func.func @transform_11(%arg0: i32) -> (i32, i32) {
    %c0_i32 = arith.constant 0 : i32
    %c0_i32_0 = arith.constant 0 : i32
    %c0_i32_1 = arith.constant 0 : i32
    return %c0_i32, %c0_i32_0 : i32, i32
  }
  func.func @transform_12(%arg0: i32) -> (i32, i32) {
    %c0_i32 = arith.constant 0 : i32
    %c0_i32_0 = arith.constant 0 : i32
    %c0_i32_1 = arith.constant 0 : i32
    return %c0_i32, %c0_i32_0 : i32, i32
  }
  func.func @transform_13(%arg0: i32) -> (i32, i32) {
    %c0_i32 = arith.constant 0 : i32
    %c0_i32_0 = arith.constant 0 : i32
    %c0_i32_1 = arith.constant 0 : i32
    return %c0_i32, %c0_i32_0 : i32, i32
  }
  func.func @transform_14(%arg0: i32) -> (i32, i32) {
    %c0_i32 = arith.constant 0 : i32
    %c0_i32_0 = arith.constant 0 : i32
    %c0_i32_1 = arith.constant 0 : i32
    return %c0_i32, %c0_i32_0 : i32, i32
  }
}

</mosaic_0001>

<llo_original>
// kernel: tile.8
$region0: #{tile.8}
  #allocation0 [shape = 's32[1]{0}', space=sflag, size = 0x4, scoped, tag = 'scoped memory for tile.8']
  %s0 = inlined_call_operand.vmem [shape: f32[4,4], index: 0, kind: input, shape index: {}]
  %s1 = inlined_call_operand.vmem [shape: f32[2,4,2,4], index: 1, kind: output, shape index: {}]
  // Predicated region
  $region2: #{tile.8} parent=0 // pred_check
    _
  $region3: #{tile.8} parent=0 // pred_check_branch
    %3 = sbr.rel (0) target = $region5
  $region4: #{tile.8} parent=0 // pred_region
    _
  $region5: #{tile.8} parent=0 // pred_fallthru
    _
  %v4 = vld [vmem:[%s0] ss:$0 sm:$0xff]
  %5 = vst [vmem:[%s1] sm:$0x3] %v4
  %s6 = scalar_lea.vmem %s1, 8
  %7 = vst [vmem:[%s6] sm:$0x3] %v4
  %s8 = scalar_lea.vmem %s0, 1
  %v9 = vld [vmem:[%s8] ss:$0 sm:$0xff]
  %s10 = scalar_lea.vmem %s1, 2
  %11 = vst [vmem:[%s10] sm:$0x3] %v9
  %s12 = scalar_lea.vmem %s1, 10
  %13 = vst [vmem:[%s12] sm:$0x3] %v9
  %s14 = scalar_lea.vmem %s0, 2
  %v15 = vld [vmem:[%s14] ss:$0 sm:$0xff]
  %s16 = scalar_lea.vmem %s1, 4
  %17 = vst [vmem:[%s16] sm:$0x3] %v15
  %s18 = scalar_lea.vmem %s1, 12
  %19 = vst [vmem:[%s18] sm:$0x3] %v15
  %s20 = scalar_lea.vmem %s0, 3
  %v21 = vld [vmem:[%s20] ss:$0 sm:$0xff]
  %s22 = scalar_lea.vmem %s1, 6
  %23 = vst [vmem:[%s22] sm:$0x3] %v21
  %s24 = scalar_lea.vmem %s1, 14
  %25 = vst [vmem:[%s24] sm:$0x3] %v21

// kernel: tile.9
$region0: #{tile.9}
  %s0 = inlined_call_operand.vmem [shape: f32[2,4,2,4], index: 0, kind: input, shape index: {}]
  %s1 = inlined_call_operand.vmem [shape: f32[8,8], index: 1, kind: output, shape index: {}]
  $region1: #{tile.9} parent=0
    #allocation0 [shape = 'u8[32768]{0}', space=vmem, size = 0x8000, scoped, tag = 'scoped mem for input reshape']
    %s3 = sshllo.u32 0, 2
    %s4 = smul.addr 2, 7
    %s5 = scalar_lea.vmem %s0, %s4
    %v6 = vld [vmem:[%s5] sm:%s3]
    %s7 = scalar_lea.vmem [#allocation0], 56
    %8 = vst [vmem:[%s7] sm:%s3] %v6
    %s9 = smul.addr 2, 6
    %s10 = scalar_lea.vmem %s0, %s9
    %v11 = vld [vmem:[%s10] sm:%s3]
    %s12 = scalar_lea.vmem [#allocation0], 48
    %13 = vst [vmem:[%s12] sm:%s3] %v11
    %s14 = smul.addr 2, 5
    %s15 = scalar_lea.vmem %s0, %s14
    %v16 = vld [vmem:[%s15] sm:%s3]
    %s17 = scalar_lea.vmem [#allocation0], 40
    %18 = vst [vmem:[%s17] sm:%s3] %v16
    %s19 = smul.addr 2, 4
    %s20 = scalar_lea.vmem %s0, %s19
    %v21 = vld [vmem:[%s20] sm:%s3]
    %s22 = scalar_lea.vmem [#allocation0], 32
    %23 = vst [vmem:[%s22] sm:%s3] %v21
    %s24 = smul.addr 2, 3
    %s25 = scalar_lea.vmem %s0, %s24
    %v26 = vld [vmem:[%s25] sm:%s3]
    %s27 = scalar_lea.vmem [#allocation0], 24
    %28 = vst [vmem:[%s27] sm:%s3] %v26
    %s29 = smul.addr 2, 2
    %s30 = scalar_lea.vmem %s0, %s29
    %v31 = vld [vmem:[%s30] sm:%s3]
    %s32 = scalar_lea.vmem [#allocation0], 16
    %33 = vst [vmem:[%s32] sm:%s3] %v31
    %s34 = scalar_lea.vmem %s0, 2
    %v35 = vld [vmem:[%s34] sm:%s3]
    %s36 = scalar_lea.vmem [#allocation0], 8
    %37 = vst [vmem:[%s36] sm:%s3] %v35
    %v38 = vld [vmem:[%s0] sm:%s3]
    %39 = vst [vmem:[#allocation0] sm:%s3] %v38
    %v40 = vld [vmem:[#allocation0] ss:$8 sm:$0xf]
    %v41 = vld [vmem:[#allocation0] ss:$8 sm:$0xf0]
    %vm42 = vcmask 1047556
    %v43 = vsel %vm42, %v41, %v40
    %vm44 = vcmask 31744
    %45 = vst.msk [vmem:[%s1] sm:$0xff] %vm44, %v43
    %s46 = scalar_lea.vmem [#allocation0], 1
    %v47 = vld [vmem:[%s46] ss:$8 sm:$0xf]
    %s48 = scalar_lea.vmem [#allocation0], 1
    %v49 = vld [vmem:[%s48] ss:$8 sm:$0xf0]
    %vm50 = vcmask 1047556
    %v51 = vsel %vm50, %v49, %v47
    %52 = vrot.lane.b32.xlu0 %v51, 4
    %v53 = vpop.permute.xlu0 %52
    %vm54 = vcmask 64544
    %55 = vst.msk [vmem:[%s1] sm:$0xff] %vm54, %v53

// kernel: _forward.1
$region0: #{_forward.1}
  #allocation0 [shape = 'u32[]', space=smem, size = 0x4, offset = 0x4, fixed_abs, tag = 'smem constant byte address 0x4 - core index']
  #allocation1 [shape = 'u32[144,128]{1,0:T(1,128)}', space=vmem, size = 0x12000, scoped, tag = 'internal scratch']
  #allocation2 [shape = 'f32[8,110]{1,0:T(8,128)}', space=vmem, size = 0x1000, scoped, tag = 'scratch operand']
  #allocation3 [shape = 'f32[8,342]{1,0:T(8,128)}', space=vmem, size = 0x3000, scoped, tag = 'scratch operand']
  %s0 = inlined_call_operand.vmem [shape: f32[8,16], index: 0, kind: input, shape index: {}]
  %s1 = inlined_call_operand.vmem [shape: f32[8,8], index: 1, kind: input, shape index: {}]
  %s2 = inlined_call_operand.vmem [shape: f32[16,110], index: 2, kind: input, shape index: {}]
  %s3 = inlined_call_operand.vmem [shape: f32[8,72], index: 3, kind: input, shape index: {}]
  %s4 = inlined_call_operand.vmem [shape: f32[8,1], index: 4, kind: input, shape index: {}, may-alias: {4,9}]
  %s5 = inlined_call_operand.vmem [shape: f32[8,1], index: 5, kind: input, shape index: {}, may-alias: {5,10}]
  %s6 = inlined_call_operand.vmem [shape: f32[1,80], index: 6, kind: input, shape index: {}]
  %s7 = inlined_call_operand.vmem [shape: f32[80,342], index: 7, kind: input, shape index: {}]
  %s8 = inlined_call_operand.vmem [shape: f32[8,72], index: 8, kind: input, shape index: {}]
  %s9 = inlined_call_operand.vmem [shape: f32[8,1], index: 9, kind: input, shape index: {}, may-alias: {4,9}]
  %s10 = inlined_call_operand.vmem [shape: f32[8,1], index: 10, kind: input, shape index: {}, may-alias: {5,10}]
  %s11 = inlined_call_operand.vmem [shape: f32[1,288], index: 11, kind: input, shape index: {}]
  %s12 = inlined_call_operand.vmem [shape: f32[6,8], index: 12, kind: input, shape index: {}]
  %s13 = inlined_call_operand.vmem [shape: f32[288,256], index: 13, kind: input, shape index: {}]
  %s14 = inlined_call_operand.vmem [shape: f32[6,256], index: 14, kind: output, shape index: {}]
  %s15 = sld [smem:[#allocation0]]
  $region66: #{_forward.1} parent=0
    _
  %s17 = ssub.s32 1, %s15
  %s18 = scalar_select 0, %s17, %s15
  // Predicated region
  $region2: #{_forward.1} parent=0 // pred_check
    _
  $region3: #{_forward.1} parent=0 // pred_check_branch
    %20 = sbr.rel (0) target = $region5
  $region4: #{_forward.1} parent=0 // pred_region
    _
  $region5: #{_forward.1} parent=0 // pred_fallthru
    _
  // Predicated region
  $region6: #{_forward.1} parent=0 // pred_check
    _
  $region7: #{_forward.1} parent=0 // pred_check_branch
    %22 = sbr.rel (0) target = $region9
  $region8: #{_forward.1} parent=0 // pred_region
    _
  $region9: #{_forward.1} parent=0 // pred_fallthru
    _
  // Predicated region
  $region10: #{_forward.1} parent=0 // pred_check
    _
  $region11: #{_forward.1} parent=0 // pred_check_branch
    %24 = sbr.rel (0) target = $region13
  $region12: #{_forward.1} parent=0 // pred_region
    _
  $region13: #{_forward.1} parent=0 // pred_fallthru
    _
  // Predicated region
  $region14: #{_forward.1} parent=0 // pred_check
    _
  $region15: #{_forward.1} parent=0 // pred_check_branch
    %26 = sbr.rel (0) target = $region17
  $region16: #{_forward.1} parent=0 // pred_region
    _
  $region17: #{_forward.1} parent=0 // pred_fallthru
    _
  // Predicated region
  $region18: #{_forward.1} parent=0 // pred_check
    _
  $region19: #{_forward.1} parent=0 // pred_check_branch
    %28 = sbr.rel (0) target = $region21
  $region20: #{_forward.1} parent=0 // pred_region
    _
  $region21: #{_forward.1} parent=0 // pred_fallthru
    _
  // Predicated region
  $region22: #{_forward.1} parent=0 // pred_check
    _
  $region23: #{_forward.1} parent=0 // pred_check_branch
    %30 = sbr.rel (0) target = $region25
  $region24: #{_forward.1} parent=0 // pred_region
    _
  $region25: #{_forward.1} parent=0 // pred_fallthru
    _
  // Predicated region
  $region26: #{_forward.1} parent=0 // pred_check
    _
  $region27: #{_forward.1} parent=0 // pred_check_branch
    %32 = sbr.rel (0) target = $region29
  $region28: #{_forward.1} parent=0 // pred_region
    _
  $region29: #{_forward.1} parent=0 // pred_fallthru
    _
  // Predicated region
  $region30: #{_forward.1} parent=0 // pred_check
    _
  $region31: #{_forward.1} parent=0 // pred_check_branch
    %34 = sbr.rel (0) target = $region33
  $region32: #{_forward.1} parent=0 // pred_region
    _
  $region33: #{_forward.1} parent=0 // pred_fallthru
    _
  // Predicated region
  $region34: #{_forward.1} parent=0 // pred_check
    _
  $region35: #{_forward.1} parent=0 // pred_check_branch
    %36 = sbr.rel (0) target = $region37
  $region36: #{_forward.1} parent=0 // pred_region
    _
  $region37: #{_forward.1} parent=0 // pred_fallthru
    _
  // Predicated region
  $region38: #{_forward.1} parent=0 // pred_check
    _
  $region39: #{_forward.1} parent=0 // pred_check_branch
    %38 = sbr.rel (0) target = $region41
  $region40: #{_forward.1} parent=0 // pred_region
    _
  $region41: #{_forward.1} parent=0 // pred_fallthru
    _
  // Predicated region
  $region42: #{_forward.1} parent=0 // pred_check
    _
  $region43: #{_forward.1} parent=0 // pred_check_branch
    %40 = sbr.rel (0) target = $region45
  $region44: #{_forward.1} parent=0 // pred_region
    _
  $region45: #{_forward.1} parent=0 // pred_fallthru
    _
  // Predicated region
  $region46: #{_forward.1} parent=0 // pred_check
    _
  $region47: #{_forward.1} parent=0 // pred_check_branch
    %42 = sbr.rel (0) target = $region49
  $region48: #{_forward.1} parent=0 // pred_region
    _
  $region49: #{_forward.1} parent=0 // pred_fallthru
    _
  // Predicated region
  $region50: #{_forward.1} parent=0 // pred_check
    _
  $region51: #{_forward.1} parent=0 // pred_check_branch
    %44 = sbr.rel (0) target = $region53
  $region52: #{_forward.1} parent=0 // pred_region
    _
  $region53: #{_forward.1} parent=0 // pred_fallthru
    _
  // Predicated region
  $region54: #{_forward.1} parent=0 // pred_check
    _
  $region55: #{_forward.1} parent=0 // pred_check_branch
    %46 = sbr.rel (0) target = $region57
  $region56: #{_forward.1} parent=0 // pred_region
    _
  $region57: #{_forward.1} parent=0 // pred_fallthru
    _
  %v47 = vld [vmem:[%s1] sm:$0xff]
  %v48 = vld [vmem:[%s0] sm:$0xff]
  %v49 = vld [vmem:[%s2] sm:$0xff]
  %v50 = vld [vmem:[%s2 + $0x8] sm:$0xff]
  %vm51 = vcmask 130048
  %v53 = vsel %vm51, %v48, 0
  %55 = vmatprep.subr.mxu0 0.0
  %56 = vmatpush1.msra.mxu0 %v49
  %57 = vmatprep.subr.mxu0 0.0
  %58 = vmatpush1.msra.mxu0 %v50
  %59 = vmatprep.subr.mxu0 0.0
  %60 = vmatpush1.msra.mxu0 0.0
  %61 = vmatprep.subr.mxu0 0.0
  %62 = vmatpush1.msra.mxu0 0.0
  %63 = vmatprep.subr.mxu0 0.0
  %64 = vmatpush1.msra.mxu0 0.0
  %65 = vmatprep.subr.mxu0 0.0
  %66 = vmatpush1.msra.mxu0 0.0
  %67 = vmatprep.subr.mxu0 0.0
  %68 = vmatpush1.msra.mxu0 0.0
  %69 = vmatprep.subr.mxu0 0.0
  %70 = vmatpush1.msra.mxu0 0.0
  %71 = vmatprep.subr.mxu0 0.0
  %72 = vmatpush1.msra.mxu0 0.0
  %73 = vmatprep.subr.mxu0 0.0
  %74 = vmatpush1.msra.mxu0 0.0
  %75 = vmatprep.subr.mxu0 0.0
  %76 = vmatpush1.msra.mxu0 0.0
  %77 = vmatprep.subr.mxu0 0.0
  %78 = vmatpush1.msra.mxu0 0.0
  %79 = vmatprep.subr.mxu0 0.0
  %80 = vmatpush1.msra.mxu0 0.0
  %81 = vmatprep.subr.mxu0 0.0
  %82 = vmatpush1.msra.mxu0 0.0
  %83 = vmatprep.subr.mxu0 0.0
  %84 = vmatpush1.msra.mxu0 0.0
  %85 = vmatprep.subr.mxu0 0.0
  %86 = vmatpush1.msra.mxu0 0.0
  %87 = vmatprep.subr.mxu0 0.0
  %88 = vmatpush1.msra.mxu0 0.0
  %89 = vmatprep.subr.mxu0 0.0
  %90 = vmatpush1.msra.mxu0 0.0
  %91 = vmatprep.subr.mxu0 0.0
  %92 = vmatpush1.msra.mxu0 0.0
  %93 = vmatprep.subr.mxu0 0.0
  %94 = vmatpush1.msra.mxu0 0.0
  %95 = vmatprep.subr.mxu0 0.0
  %96 = vmatpush1.msra.mxu0 0.0
  %97 = vmatprep.subr.mxu0 0.0
  %98 = vmatpush1.msra.mxu0 0.0
  %99 = vmatprep.subr.mxu0 0.0
  %100 = vmatpush1.msra.mxu0 0.0
  %101 = vmatprep.subr.mxu0 0.0
  %102 = vmatpush1.msra.mxu0 0.0
  %103 = vmatprep.subr.mxu0 0.0
  %104 = vmatpush1.msra.mxu0 0.0
  %105 = vmatprep.subr.mxu0 0.0
  %106 = vmatpush1.msra.mxu0 0.0
  %107 = vmatprep.subr.mxu0 0.0
  %108 = vmatpush1.msra.mxu0 0.0
  %109 = vmatprep.subr.mxu0 0.0
  %110 = vmatpush1.msra.mxu0 0.0
  %111 = vmatprep.subr.mxu0 0.0
  %112 = vmatpush1.msra.mxu0 0.0
  %113 = vmatprep.subr.mxu0 0.0
  %114 = vmatpush1.msra.mxu0 0.0
  %115 = vmatprep.subr.mxu0 0.0
  %116 = vmatpush1.msra.mxu0 0.0
  %117 = vmatprep.subr.mxu0 0.0
  %118 = vmatpush1.msra.mxu0 0.0
  %119 = vmatprep.mubr.f32.mxu0 0.0
  %120 = vmatmul.mubr.f32.gmra.mrb[0].mxu0 %v53
  %v121 = vpop.f32.mrb[0].mxu0
  %v122 = vadd.f32 0.0, %v121
  %v123 = vpop.f32.mrb[0].mxu0
  %124 = vdwg.mxu0
  %vm125 = vcmask 900096
  %126 = vst.msk [vmem:[#allocation2] sm:$0xff] %vm125, %v122
  %v127 = vld [vmem:[#allocation2] sm:$0xff]
  %129 = vrot.lane.b32.xlu0 %v127, 127
  %v130 = vpop.permute.xlu0 %129
  %132 = vrot.lane.b32.xlu0 %v127, 126
  %v133 = vpop.permute.xlu0 %132
  %135 = vrot.lane.b32.xlu0 %v127, 118
  %v136 = vpop.permute.xlu0 %135
  %138 = vrot.lane.b32.xlu0 %v127, 117
  %v139 = vpop.permute.xlu0 %138
  %141 = vrot.lane.b32.xlu0 %v127, 116
  %v142 = vpop.permute.xlu0 %141
  %144 = vrot.lane.b32.xlu0 %v127, 108
  %v145 = vpop.permute.xlu0 %144
  %147 = vrot.lane.b32.xlu0 %v127, 107
  %v148 = vpop.permute.xlu0 %147
  %150 = vrot.lane.b32.xlu0 %v127, 106
  %v151 = vpop.permute.xlu0 %150
  %v153 = vld [vmem:[%s3] sm:$0xff]
  %vm154 = vcmask 588800
  %v156 = vsel %vm154, %v153, 0
  %158 = vmatprep.subr.mxu0 0.0
  %159 = vmatpush1.msra.mxu0 %v127
  %160 = vmatprep.subr.mxu0 0.0
  %161 = vmatpush1.msra.mxu0 %v130
  %162 = vmatprep.subr.mxu0 0.0
  %163 = vmatpush1.msra.mxu0 %v133
  %164 = vmatprep.subr.mxu0 0.0
  %165 = vmatpush1.msra.mxu0 %v136
  %166 = vmatprep.subr.mxu0 0.0
  %167 = vmatpush1.msra.mxu0 %v139
  %168 = vmatprep.subr.mxu0 0.0
  %169 = vmatpush1.msra.mxu0 %v142
  %170 = vmatprep.subr.mxu0 0.0
  %171 = vmatpush1.msra.mxu0 %v145
  %172 = vmatprep.subr.mxu0 0.0
  %173 = vmatpush1.msra.mxu0 %v148
  %174 = vmatprep.subr.mxu0 0.0
  %175 = vmatpush1.msra.mxu0 %v151
  %176 = vmatprep.subr.mxu0 0.0
  %177 = vmatpush1.msra.mxu0 0.0
  %178 = vmatprep.subr.mxu0 0.0
  %179 = vmatpush1.msra.mxu0 0.0
  %180 = vmatprep.subr.mxu0 0.0
  %181 = vmatpush1.msra.mxu0 0.0
  %182 = vmatprep.subr.mxu0 0.0
  %183 = vmatpush1.msra.mxu0 0.0
  %184 = vmatprep.subr.mxu0 0.0
  %185 = vmatpush1.msra.mxu0 0.0
  %186 = vmatprep.subr.mxu0 0.0
  %187 = vmatpush1.msra.mxu0 0.0
  %188 = vmatprep.subr.mxu0 0.0
  %189 = vmatpush1.msra.mxu0 0.0
  %190 = vmatprep.subr.mxu0 0.0
  %191 = vmatpush1.msra.mxu0 0.0
  %192 = vmatprep.subr.mxu0 0.0
  %193 = vmatpush1.msra.mxu0 0.0
  %194 = vmatprep.subr.mxu0 0.0
  %195 = vmatpush1.msra.mxu0 0.0
  %196 = vmatprep.subr.mxu0 0.0
  %197 = vmatpush1.msra.mxu0 0.0
  %198 = vmatprep.subr.mxu0 0.0
  %199 = vmatpush1.msra.mxu0 0.0
  %200 = vmatprep.subr.mxu0 0.0
  %201 = vmatpush1.msra.mxu0 0.0
  %202 = vmatprep.subr.mxu0 0.0
  %203 = vmatpush1.msra.mxu0 0.0
  %204 = vmatprep.subr.mxu0 0.0
  %205 = vmatpush1.msra.mxu0 0.0
  %206 = vmatprep.subr.mxu0 0.0
  %207 = vmatpush1.msra.mxu0 0.0
  %208 = vmatprep.subr.mxu0 0.0
  %209 = vmatpush1.msra.mxu0 0.0
  %210 = vmatprep.subr.mxu0 0.0
  %211 = vmatpush1.msra.mxu0 0.0
  %212 = vmatprep.subr.mxu0 0.0
  %213 = vmatpush1.msra.mxu0 0.0
  %214 = vmatprep.subr.mxu0 0.0
  %215 = vmatpush1.msra.mxu0 0.0
  %216 = vmatprep.subr.mxu0 0.0
  %217 = vmatpush1.msra.mxu0 0.0
  %218 = vmatprep.subr.mxu0 0.0
  %219 = vmatpush1.msra.mxu0 0.0
  %220 = vmatprep.subr.mxu0 0.0
  %221 = vmatpush1.msra.mxu0 0.0
  %222 = vmatprep.mubr.f32.mxu0 0.0
  %223 = vmatmul.mubr.f32.gmra.mrb[0].mxu0 %v156
  %v224 = vpop.f32.mrb[0].mxu0
  %v225 = vadd.f32 0.0, %v224
  %v226 = vpop.f32.mrb[0].mxu0
  %227 = vdwg.mxu0
  %v228 = vmax.f32 %v225, 0.0
  %v229 = vld [vmem:[%s6] sm:$0x1]
  %v231 = vlaneseq
  %v232 = vshrl.u32 %v231, 7
  %v233 = vsub.s32 0, %v232
  %v234 = vrot.slane %v229, %v233
  %v236 = vmul.f32 %v228, %v234
  %vm237 = vcmask 64512
  %v239 = vsel %vm237, %v47, 0
  %241 = vmatprep.subr.mxu0 0.0
  %242 = vmatpush1.msra.mxu0 %v236
  %243 = vmatprep.subr.mxu0 0.0
  %244 = vmatpush1.msra.mxu0 0.0
  %245 = vmatprep.subr.mxu0 0.0
  %246 = vmatpush1.msra.mxu0 0.0
  %247 = vmatprep.subr.mxu0 0.0
  %248 = vmatpush1.msra.mxu0 0.0
  %249 = vmatprep.subr.mxu0 0.0
  %250 = vmatpush1.msra.mxu0 0.0
  %251 = vmatprep.subr.mxu0 0.0
  %252 = vmatpush1.msra.mxu0 0.0
  %253 = vmatprep.subr.mxu0 0.0
  %254 = vmatpush1.msra.mxu0 0.0
  %255 = vmatprep.subr.mxu0 0.0
  %256 = vmatpush1.msra.mxu0 0.0
  %257 = vmatprep.subr.mxu0 0.0
  %258 = vmatpush1.msra.mxu0 0.0
  %259 = vmatprep.subr.mxu0 0.0
  %260 = vmatpush1.msra.mxu0 0.0
  %261 = vmatprep.subr.mxu0 0.0
  %262 = vmatpush1.msra.mxu0 0.0
  %263 = vmatprep.subr.mxu0 0.0
  %264 = vmatpush1.msra.mxu0 0.0
  %265 = vmatprep.subr.mxu0 0.0
  %266 = vmatpush1.msra.mxu0 0.0
  %267 = vmatprep.subr.mxu0 0.0
  %268 = vmatpush1.msra.mxu0 0.0
  %269 = vmatprep.subr.mxu0 0.0
  %270 = vmatpush1.msra.mxu0 0.0
  %271 = vmatprep.subr.mxu0 0.0
  %272 = vmatpush1.msra.mxu0 0.0
  %273 = vmatprep.subr.mxu0 0.0
  %274 = vmatpush1.msra.mxu0 0.0
  %275 = vmatprep.subr.mxu0 0.0
  %276 = vmatpush1.msra.mxu0 0.0
  %277 = vmatprep.subr.mxu0 0.0
  %278 = vmatpush1.msra.mxu0 0.0
  %279 = vmatprep.subr.mxu0 0.0
  %280 = vmatpush1.msra.mxu0 0.0
  %281 = vmatprep.subr.mxu0 0.0
  %282 = vmatpush1.msra.mxu0 0.0
  %283 = vmatprep.subr.mxu0 0.0
  %284 = vmatpush1.msra.mxu0 0.0
  %285 = vmatprep.subr.mxu0 0.0
  %286 = vmatpush1.msra.mxu0 0.0
  %287 = vmatprep.subr.mxu0 0.0
  %288 = vmatpush1.msra.mxu0 0.0
  %289 = vmatprep.subr.mxu0 0.0
  %290 = vmatpush1.msra.mxu0 0.0
  %291 = vmatprep.subr.mxu0 0.0
  %292 = vmatpush1.msra.mxu0 0.0
  %293 = vmatprep.subr.mxu0 0.0
  %294 = vmatpush1.msra.mxu0 0.0
  %295 = vmatprep.subr.mxu0 0.0
  %296 = vmatpush1.msra.mxu0 0.0
  %297 = vmatprep.subr.mxu0 0.0
  %298 = vmatpush1.msra.mxu0 0.0
  %299 = vmatprep.subr.mxu0 0.0
  %300 = vmatpush1.msra.mxu0 0.0
  %301 = vmatprep.subr.mxu0 0.0
  %302 = vmatpush1.msra.mxu0 0.0
  %303 = vmatprep.subr.mxu0 0.0
  %304 = vmatpush1.msra.mxu0 0.0
  %305 = vmatprep.mubr.f32.mxu0 0.0
  %306 = vmatmul.mubr.f32.gmra.mrb[0].mxu0 %v239
  %v307 = vpop.f32.mrb[0].mxu0
  %v308 = vadd.f32 0.0, %v307
  %v309 = vpop.f32.mrb[0].mxu0
  %310 = vdwg.mxu0
  %vm311 = vcmask 654336
  %v312 = vsel %vm311, %v308, 0.0
  %313 = vadd.xlane.f32.xlu0 %v312
  %v314 = vpop.xlane.xlu0 %313
  %v315 = vrcp.pop 128.0
  %v316 = vmul.f32 %v314, %v315
  %v317 = vsub.f32 %v228, %v316
  %v318 = vmul.f32 %v317, %v234
  %v319 = vmul.f32 %v318, %v318
  %320 = vmatprep.subr.mxu0 0.0
  %321 = vmatpush1.msra.mxu0 %v319
  %322 = vmatprep.subr.mxu0 0.0
  %323 = vmatpush1.msra.mxu0 0.0
  %324 = vmatprep.subr.mxu0 0.0
  %325 = vmatpush1.msra.mxu0 0.0
  %326 = vmatprep.subr.mxu0 0.0
  %327 = vmatpush1.msra.mxu0 0.0
  %328 = vmatprep.subr.mxu0 0.0
  %329 = vmatpush1.msra.mxu0 0.0
  %330 = vmatprep.subr.mxu0 0.0
  %331 = vmatpush1.msra.mxu0 0.0
  %332 = vmatprep.subr.mxu0 0.0
  %333 = vmatpush1.msra.mxu0 0.0
  %334 = vmatprep.subr.mxu0 0.0
  %335 = vmatpush1.msra.mxu0 0.0
  %336 = vmatprep.subr.mxu0 0.0
  %337 = vmatpush1.msra.mxu0 0.0
  %338 = vmatprep.subr.mxu0 0.0
  %339 = vmatpush1.msra.mxu0 0.0
  %340 = vmatprep.subr.mxu0 0.0
  %341 = vmatpush1.msra.mxu0 0.0
  %342 = vmatprep.subr.mxu0 0.0
  %343 = vmatpush1.msra.mxu0 0.0
  %344 = vmatprep.subr.mxu0 0.0
  %345 = vmatpush1.msra.mxu0 0.0
  %346 = vmatprep.subr.mxu0 0.0
  %347 = vmatpush1.msra.mxu0 0.0
  %348 = vmatprep.subr.mxu0 0.0
  %349 = vmatpush1.msra.mxu0 0.0
  %350 = vmatprep.subr.mxu0 0.0
  %351 = vmatpush1.msra.mxu0 0.0
  %352 = vmatprep.subr.mxu0 0.0
  %353 = vmatpush1.msra.mxu0 0.0
  %354 = vmatprep.subr.mxu0 0.0
  %355 = vmatpush1.msra.mxu0 0.0
  %356 = vmatprep.subr.mxu0 0.0
  %357 = vmatpush1.msra.mxu0 0.0
  %358 = vmatprep.subr.mxu0 0.0
  %359 = vmatpush1.msra.mxu0 0.0
  %360 = vmatprep.subr.mxu0 0.0
  %361 = vmatpush1.msra.mxu0 0.0
  %362 = vmatprep.subr.mxu0 0.0
  %363 = vmatpush1.msra.mxu0 0.0
  %364 = vmatprep.subr.mxu0 0.0
  %365 = vmatpush1.msra.mxu0 0.0
  %366 = vmatprep.subr.mxu0 0.0
  %367 = vmatpush1.msra.mxu0 0.0
  %368 = vmatprep.subr.mxu0 0.0
  %369 = vmatpush1.msra.mxu0 0.0
  %370 = vmatprep.subr.mxu0 0.0
  %371 = vmatpush1.msra.mxu0 0.0
  %372 = vmatprep.subr.mxu0 0.0
  %373 = vmatpush1.msra.mxu0 0.0
  %374 = vmatprep.subr.mxu0 0.0
  %375 = vmatpush1.msra.mxu0 0.0
  %376 = vmatprep.subr.mxu0 0.0
  %377 = vmatpush1.msra.mxu0 0.0
  %378 = vmatprep.subr.mxu0 0.0
  %379 = vmatpush1.msra.mxu0 0.0
  %380 = vmatprep.subr.mxu0 0.0
  %381 = vmatpush1.msra.mxu0 0.0
  %382 = vmatprep.subr.mxu0 0.0
  %383 = vmatpush1.msra.mxu0 0.0
  %384 = vmatprep.mubr.f32.mxu0 0.0
  %385 = vmatmul.mubr.f32.gmra.mrb[0].mxu0 %v239
  %v386 = vpop.f32.mrb[0].mxu0
  %v387 = vadd.f32 0.0, %v386
  %v388 = vpop.f32.mrb[0].mxu0
  %389 = vdwg.mxu0
  %v390 = vsel %vm311, %v387, 0.0
  %391 = vadd.xlane.f32.xlu0 %v390
  %v392 = vpop.xlane.xlu0 %391
  %v393 = vmul.f32 %v392, %v315
  %v394 = vadd.f32 %v393, 1e-05
  %v395 = vrsqrt.pop %v394
  %v396 = vmul.f32 %v317, %v395
  %v397 = vld [vmem:[%s4] sm:$0xff]
  %399 = vset.pattern.permute.xlu0 0
  %400 = vperm.xlu0 %399, %v397
  %v401 = vpop.permute.xlu0 %400
  %v403 = vmul.f32 %v396, %v401
  %v404 = vld [vmem:[%s5] sm:$0xff]
  %406 = vset.pattern.permute.xlu0 0
  %407 = vperm.xlu0 %406, %v404
  %v408 = vpop.permute.xlu0 %407
  %v410 = vadd.f32 %v403, %v408
  %v411 = vld [vmem:[%s7] sm:$0xff]
  %v412 = vld [vmem:[%s7 + $0x8] sm:$0xff]
  %v413 = vld [vmem:[%s7 + $0x10] sm:$0xff]
  %v414 = vld [vmem:[%s7 + $0x18] sm:$0xff]
  %v415 = vld [vmem:[%s7 + $0x20] sm:$0xff]
  %v416 = vld [vmem:[%s7 + $0x28] sm:$0xff]
  %v417 = vld [vmem:[%s7 + $0x30] sm:$0xff]
  %v418 = vld [vmem:[%s7 + $0x38] sm:$0xff]
  %v419 = vld [vmem:[%s7 + $0x40] sm:$0xff]
  %v420 = vld [vmem:[%s7 + $0x48] sm:$0xff]
  %v421 = vld [vmem:[%s7 + $0x50] sm:$0xff]
  %v422 = vld [vmem:[%s7 + $0x58] sm:$0xff]
  %v423 = vld [vmem:[%s7 + $0x60] sm:$0xff]
  %v424 = vld [vmem:[%s7 + $0x68] sm:$0xff]
  %v425 = vld [vmem:[%s7 + $0x70] sm:$0xff]
  %v426 = vld [vmem:[%s7 + $0x78] sm:$0xff]
  %v427 = vld [vmem:[%s7 + $0x80] sm:$0xff]
  %v428 = vld [vmem:[%s7 + $0x88] sm:$0xff]
  %v429 = vld [vmem:[%s7 + $0x90] sm:$0xff]
  %v430 = vld [vmem:[%s7 + $0x98] sm:$0xff]
  %v431 = vld [vmem:[%s7 + $0xa0] sm:$0xff]
  %v432 = vld [vmem:[%s7 + $0xa8] sm:$0xff]
  %v433 = vld [vmem:[%s7 + $0xb0] sm:$0xff]
  %v434 = vld [vmem:[%s7 + $0xb8] sm:$0xff]
  %v435 = vld [vmem:[%s7 + $0xc0] sm:$0xff]
  %v436 = vld [vmem:[%s7 + $0xc8] sm:$0xff]
  %v437 = vld [vmem:[%s7 + $0xd0] sm:$0xff]
  %v438 = vld [vmem:[%s7 + $0xd8] sm:$0xff]
  %v439 = vld [vmem:[%s7 + $0xe0] sm:$0xff]
  %v440 = vld [vmem:[%s7 + $0xe8] sm:$0xff]
  %v442 = vsel %vm311, %v410, 0
  %444 = vmatprep.subr.mxu0 %v412
  %445 = vmatpush1.msra.mxu0 %v411
  %446 = vmatprep.subr.mxu0 %v415
  %447 = vmatpush1.msra.mxu0 %v414
  %448 = vmatprep.subr.mxu0 %v418
  %449 = vmatpush1.msra.mxu0 %v417
  %450 = vmatprep.subr.mxu0 %v421
  %451 = vmatpush1.msra.mxu0 %v420
  %452 = vmatprep.subr.mxu0 %v424
  %453 = vmatpush1.msra.mxu0 %v423
  %454 = vmatprep.subr.mxu0 %v427
  %455 = vmatpush1.msra.mxu0 %v426
  %456 = vmatprep.subr.mxu0 %v430
  %457 = vmatpush1.msra.mxu0 %v429
  %458 = vmatprep.subr.mxu0 %v433
  %459 = vmatpush1.msra.mxu0 %v432
  %460 = vmatprep.subr.mxu0 %v436
  %461 = vmatpush1.msra.mxu0 %v435
  %462 = vmatprep.subr.mxu0 %v439
  %463 = vmatpush1.msra.mxu0 %v438
  %464 = vmatprep.subr.mxu0 0.0
  %465 = vmatpush1.msra.mxu0 0.0
  %466 = vmatprep.subr.mxu0 0.0
  %467 = vmatpush1.msra.mxu0 0.0
  %468 = vmatprep.subr.mxu0 0.0
  %469 = vmatpush1.msra.mxu0 0.0
  %470 = vmatprep.subr.mxu0 0.0
  %471 = vmatpush1.msra.mxu0 0.0
  %472 = vmatprep.subr.mxu0 0.0
  %473 = vmatpush1.msra.mxu0 0.0
  %474 = vmatprep.subr.mxu0 0.0
  %475 = vmatpush1.msra.mxu0 0.0
  %476 = vmatprep.subr.mxu0 0.0
  %477 = vmatpush1.msra.mxu0 0.0
  %478 = vmatprep.subr.mxu0 0.0
  %479 = vmatpush1.msra.mxu0 0.0
  %480 = vmatprep.subr.mxu0 0.0
  %481 = vmatpush1.msra.mxu0 0.0
  %482 = vmatprep.subr.mxu0 0.0
  %483 = vmatpush1.msra.mxu0 0.0
  %484 = vmatprep.subr.mxu0 0.0
  %485 = vmatpush1.msra.mxu0 0.0
  %486 = vmatprep.subr.mxu0 0.0
  %487 = vmatpush1.msra.mxu0 0.0
  %488 = vmatprep.subr.mxu0 0.0
  %489 = vmatpush1.msra.mxu0 0.0
  %490 = vmatprep.subr.mxu0 0.0
  %491 = vmatpush1.msra.mxu0 0.0
  %492 = vmatprep.subr.mxu0 0.0
  %493 = vmatpush1.msra.mxu0 0.0
  %494 = vmatprep.subr.mxu0 0.0
  %495 = vmatpush1.msra.mxu0 0.0
  %496 = vmatprep.subr.mxu0 0.0
  %497 = vmatpush1.msra.mxu0 0.0
  %498 = vmatprep.subr.mxu0 0.0
  %499 = vmatpush1.msra.mxu0 0.0
  %500 = vmatprep.subr.mxu0 0.0
  %501 = vmatpush1.msra.mxu0 0.0
  %502 = vmatprep.subr.mxu0 0.0
  %503 = vmatpush1.msra.mxu0 0.0
  %504 = vmatprep.subr.mxu0 0.0
  %505 = vmatpush1.msra.mxu0 0.0
  %506 = vmatprep.subr.mxu0 0.0
  %507 = vmatpush1.msra.mxu0 0.0
  %508 = vmatprep.mubr.f32.mxu0 0.0
  %509 = vmatmul.mubr.f32.gmra.mrb[0].mxu0 %v442
  %v510 = vpop.f32.mrb[0].mxu0
  %v511 = vadd.f32 0.0, %v510
  %v512 = vpop.f32.mrb[0].mxu0
  %v513 = vadd.f32 0.0, %v512
  %514 = vdwg.mxu0
  %515 = vmatprep.subr.mxu0 0.0
  %516 = vmatpush1.msra.mxu0 %v413
  %517 = vmatprep.subr.mxu0 0.0
  %518 = vmatpush1.msra.mxu0 %v416
  %519 = vmatprep.subr.mxu0 0.0
  %520 = vmatpush1.msra.mxu0 %v419
  %521 = vmatprep.subr.mxu0 0.0
  %522 = vmatpush1.msra.mxu0 %v422
  %523 = vmatprep.subr.mxu0 0.0
  %524 = vmatpush1.msra.mxu0 %v425
  %525 = vmatprep.subr.mxu0 0.0
  %526 = vmatpush1.msra.mxu0 %v428
  %527 = vmatprep.subr.mxu0 0.0
  %528 = vmatpush1.msra.mxu0 %v431
  %529 = vmatprep.subr.mxu0 0.0
  %530 = vmatpush1.msra.mxu0 %v434
  %531 = vmatprep.subr.mxu0 0.0
  %532 = vmatpush1.msra.mxu0 %v437
  %533 = vmatprep.subr.mxu0 0.0
  %534 = vmatpush1.msra.mxu0 %v440
  %535 = vmatprep.subr.mxu0 0.0
  %536 = vmatpush1.msra.mxu0 0.0
  %537 = vmatprep.subr.mxu0 0.0
  %538 = vmatpush1.msra.mxu0 0.0
  %539 = vmatprep.subr.mxu0 0.0
  %540 = vmatpush1.msra.mxu0 0.0
  %541 = vmatprep.subr.mxu0 0.0
  %542 = vmatpush1.msra.mxu0 0.0
  %543 = vmatprep.subr.mxu0 0.0
  %544 = vmatpush1.msra.mxu0 0.0
  %545 = vmatprep.subr.mxu0 0.0
  %546 = vmatpush1.msra.mxu0 0.0
  %547 = vmatprep.subr.mxu0 0.0
  %548 = vmatpush1.msra.mxu0 0.0
  %549 = vmatprep.subr.mxu0 0.0
  %550 = vmatpush1.msra.mxu0 0.0
  %551 = vmatprep.subr.mxu0 0.0
  %552 = vmatpush1.msra.mxu0 0.0
  %553 = vmatprep.subr.mxu0 0.0
  %554 = vmatpush1.msra.mxu0 0.0
  %555 = vmatprep.subr.mxu0 0.0
  %556 = vmatpush1.msra.mxu0 0.0
  %557 = vmatprep.subr.mxu0 0.0
  %558 = vmatpush1.msra.mxu0 0.0
  %559 = vmatprep.subr.mxu0 0.0
  %560 = vmatpush1.msra.mxu0 0.0
  %561 = vmatprep.subr.mxu0 0.0
  %562 = vmatpush1.msra.mxu0 0.0
  %563 = vmatprep.subr.mxu0 0.0
  %564 = vmatpush1.msra.mxu0 0.0
  %565 = vmatprep.subr.mxu0 0.0
  %566 = vmatpush1.msra.mxu0 0.0
  %567 = vmatprep.subr.mxu0 0.0
  %568 = vmatpush1.msra.mxu0 0.0
  %569 = vmatprep.subr.mxu0 0.0
  %570 = vmatpush1.msra.mxu0 0.0
  %571 = vmatprep.subr.mxu0 0.0
  %572 = vmatpush1.msra.mxu0 0.0
  %573 = vmatprep.subr.mxu0 0.0
  %574 = vmatpush1.msra.mxu0 0.0
  %575 = vmatprep.subr.mxu0 0.0
  %576 = vmatpush1.msra.mxu0 0.0
  %577 = vmatprep.subr.mxu0 0.0
  %578 = vmatpush1.msra.mxu0 0.0
  %579 = vmatprep.mubr.f32.mxu0 0.0
  %580 = vmatmul.mubr.f32.gmra.mrb[0].mxu0 %v442
  %v581 = vpop.f32.mrb[0].mxu0
  %v582 = vadd.f32 0.0, %v581
  %v583 = vpop.f32.mrb[0].mxu0
  %584 = vdwg.mxu0
  %585 = vst [vmem:[#allocation3] sm:$0xff] %v511
  %586 = vst [vmem:[#allocation3 + $0x8] sm:$0xff] %v513
  %vm587 = vcmask 703488
  %588 = vst.msk [vmem:[#allocation3 + $0x10] sm:$0xff] %vm587, %v582
  %v589 = vld [vmem:[#allocation3] sm:$0xff]
  %v590 = vld [vmem:[#allocation3 + $0x8] sm:$0xff]
  %v591 = vld [vmem:[#allocation3 + $0x10] sm:$0xff]
  %595 = vrot.lane.b32.xlu0 %v589, 127
  %v596 = vpop.permute.xlu0 %595
  %597 = vrot.lane.b32.xlu0 %v590, 127
  %v598 = vpop.permute.xlu0 %597
  %599 = vrot.lane.b32.xlu0 %v591, 127
  %v600 = vpop.permute.xlu0 %599
  %vm601 = vcmask 1039360
  %v602 = vsel %vm601, %v596, %v598
  %v603 = vsel %vm601, %v598, %v600
  %607 = vrot.lane.b32.xlu0 %v589, 126
  %v608 = vpop.permute.xlu0 %607
  %609 = vrot.lane.b32.xlu0 %v590, 126
  %v610 = vpop.permute.xlu0 %609
  %611 = vrot.lane.b32.xlu0 %v591, 126
  %v612 = vpop.permute.xlu0 %611
  %vm613 = vcmask 1031168
  %v614 = vsel %vm613, %v608, %v610
  %v615 = vsel %vm613, %v610, %v612
  %619 = vrot.lane.b32.xlu0 %v589, 110
  %v620 = vpop.permute.xlu0 %619
  %621 = vrot.lane.b32.xlu0 %v590, 110
  %v622 = vpop.permute.xlu0 %621
  %623 = vrot.lane.b32.xlu0 %v591, 110
  %v624 = vpop.permute.xlu0 %623
  %v625 = vsel %vm125, %v620, %v622
  %v626 = vsel %vm125, %v622, %v624
  %630 = vrot.lane.b32.xlu0 %v589, 109
  %v631 = vpop.permute.xlu0 %630
  %632 = vrot.lane.b32.xlu0 %v590, 109
  %v633 = vpop.permute.xlu0 %632
  %634 = vrot.lane.b32.xlu0 %v591, 109
  %v635 = vpop.permute.xlu0 %634
  %vm636 = vcmask 891904
  %v637 = vsel %vm636, %v631, %v633
  %v638 = vsel %vm636, %v633, %v635
  %642 = vrot.lane.b32.xlu0 %v589, 108
  %v643 = vpop.permute.xlu0 %642
  %644 = vrot.lane.b32.xlu0 %v590, 108
  %v645 = vpop.permute.xlu0 %644
  %646 = vrot.lane.b32.xlu0 %v591, 108
  %v647 = vpop.permute.xlu0 %646
  %vm648 = vcmask 883712
  %v649 = vsel %vm648, %v643, %v645
  %v650 = vsel %vm648, %v645, %v647
  %654 = vrot.lane.b32.xlu0 %v589, 92
  %v655 = vpop.permute.xlu0 %654
  %656 = vrot.lane.b32.xlu0 %v590, 92
  %v657 = vpop.permute.xlu0 %656
  %658 = vrot.lane.b32.xlu0 %v591, 92
  %v659 = vpop.permute.xlu0 %658
  %vm660 = vcmask 752640
  %v661 = vsel %vm660, %v655, %v657
  %v662 = vsel %vm660, %v657, %v659
  %666 = vrot.lane.b32.xlu0 %v589, 91
  %v667 = vpop.permute.xlu0 %666
  %668 = vrot.lane.b32.xlu0 %v590, 91
  %v669 = vpop.permute.xlu0 %668
  %670 = vrot.lane.b32.xlu0 %v591, 91
  %v671 = vpop.permute.xlu0 %670
  %vm672 = vcmask 744448
  %v673 = vsel %vm672, %v667, %v669
  %v674 = vsel %vm672, %v669, %v671
  %678 = vrot.lane.b32.xlu0 %v589, 90
  %v679 = vpop.permute.xlu0 %678
  %680 = vrot.lane.b32.xlu0 %v590, 90
  %v681 = vpop.permute.xlu0 %680
  %682 = vrot.lane.b32.xlu0 %v591, 90
  %v683 = vpop.permute.xlu0 %682
  %vm684 = vcmask 736256
  %v685 = vsel %vm684, %v679, %v681
  %v686 = vsel %vm684, %v681, %v683
  %v690 = vld [vmem:[%s8] sm:$0xff]
  %v692 = vsel %vm154, %v690, 0
  %694 = vmatprep.subr.mxu0 %v590
  %695 = vmatpush1.msra.mxu0 %v589
  %696 = vmatprep.subr.mxu0 %v603
  %697 = vmatpush1.msra.mxu0 %v602
  %698 = vmatprep.subr.mxu0 %v615
  %699 = vmatpush1.msra.mxu0 %v614
  %700 = vmatprep.subr.mxu0 %v626
  %701 = vmatpush1.msra.mxu0 %v625
  %702 = vmatprep.subr.mxu0 %v638
  %703 = vmatpush1.msra.mxu0 %v637
  %704 = vmatprep.subr.mxu0 %v650
  %705 = vmatpush1.msra.mxu0 %v649
  %706 = vmatprep.subr.mxu0 %v662
  %707 = vmatpush1.msra.mxu0 %v661
  %708 = vmatprep.subr.mxu0 %v674
  %709 = vmatpush1.msra.mxu0 %v673
  %710 = vmatprep.subr.mxu0 %v686
  %711 = vmatpush1.msra.mxu0 %v685
  %712 = vmatprep.subr.mxu0 0.0
  %713 = vmatpush1.msra.mxu0 0.0
  %714 = vmatprep.subr.mxu0 0.0
  %715 = vmatpush1.msra.mxu0 0.0
  %716 = vmatprep.subr.mxu0 0.0
  %717 = vmatpush1.msra.mxu0 0.0
  %718 = vmatprep.subr.mxu0 0.0
  %719 = vmatpush1.msra.mxu0 0.0
  %720 = vmatprep.subr.mxu0 0.0
  %721 = vmatpush1.msra.mxu0 0.0
  %722 = vmatprep.subr.mxu0 0.0
  %723 = vmatpush1.msra.mxu0 0.0
  %724 = vmatprep.subr.mxu0 0.0
  %725 = vmatpush1.msra.mxu0 0.0
  %726 = vmatprep.subr.mxu0 0.0
  %727 = vmatpush1.msra.mxu0 0.0
  %728 = vmatprep.subr.mxu0 0.0
  %729 = vmatpush1.msra.mxu0 0.0
  %730 = vmatprep.subr.mxu0 0.0
  %731 = vmatpush1.msra.mxu0 0.0
  %732 = vmatprep.subr.mxu0 0.0
  %733 = vmatpush1.msra.mxu0 0.0
  %734 = vmatprep.subr.mxu0 0.0
  %735 = vmatpush1.msra.mxu0 0.0
  %736 = vmatprep.subr.mxu0 0.0
  %737 = vmatpush1.msra.mxu0 0.0
  %738 = vmatprep.subr.mxu0 0.0
  %739 = vmatpush1.msra.mxu0 0.0
  %740 = vmatprep.subr.mxu0 0.0
  %741 = vmatpush1.msra.mxu0 0.0
  %742 = vmatprep.subr.mxu0 0.0
  %743 = vmatpush1.msra.mxu0 0.0
  %744 = vmatprep.subr.mxu0 0.0
  %745 = vmatpush1.msra.mxu0 0.0
  %746 = vmatprep.subr.mxu0 0.0
  %747 = vmatpush1.msra.mxu0 0.0
  %748 = vmatprep.subr.mxu0 0.0
  %749 = vmatpush1.msra.mxu0 0.0
  %750 = vmatprep.subr.mxu0 0.0
  %751 = vmatpush1.msra.mxu0 0.0
  %752 = vmatprep.subr.mxu0 0.0
  %753 = vmatpush1.msra.mxu0 0.0
  %754 = vmatprep.subr.mxu0 0.0
  %755 = vmatpush1.msra.mxu0 0.0
  %756 = vmatprep.subr.mxu0 0.0
  %757 = vmatpush1.msra.mxu0 0.0
  %758 = vmatprep.mubr.f32.mxu0 0.0
  %759 = vmatmul.mubr.f32.gmra.mrb[0].mxu0 %v692
  %v760 = vpop.f32.mrb[0].mxu0
  %v761 = vadd.f32 0.0, %v760
  %v762 = vpop.f32.mrb[0].mxu0
  %v763 = vadd.f32 0.0, %v762
  %764 = vdwg.mxu0
  %765 = vmatprep.subr.mxu0 0.0
  %766 = vmatpush1.msra.mxu0 %v591
  %767 = vmatprep.subr.mxu0 0.0
  %768 = vmatpush1.msra.mxu0 %v600
  %769 = vmatprep.subr.mxu0 0.0
  %770 = vmatpush1.msra.mxu0 %v612
  %771 = vmatprep.subr.mxu0 0.0
  %772 = vmatpush1.msra.mxu0 %v624
  %773 = vmatprep.subr.mxu0 0.0
  %774 = vmatpush1.msra.mxu0 %v635
  %775 = vmatprep.subr.mxu0 0.0
  %776 = vmatpush1.msra.mxu0 %v647
  %777 = vmatprep.subr.mxu0 0.0
  %778 = vmatpush1.msra.mxu0 %v659
  %779 = vmatprep.subr.mxu0 0.0
  %780 = vmatpush1.msra.mxu0 %v671
  %781 = vmatprep.subr.mxu0 0.0
  %782 = vmatpush1.msra.mxu0 %v683
  %783 = vmatprep.subr.mxu0 0.0
  %784 = vmatpush1.msra.mxu0 0.0
  %785 = vmatprep.subr.mxu0 0.0
  %786 = vmatpush1.msra.mxu0 0.0
  %787 = vmatprep.subr.mxu0 0.0
  %788 = vmatpush1.msra.mxu0 0.0
  %789 = vmatprep.subr.mxu0 0.0
  %790 = vmatpush1.msra.mxu0 0.0
  %791 = vmatprep.subr.mxu0 0.0
  %792 = vmatpush1.msra.mxu0 0.0
  %793 = vmatprep.subr.mxu0 0.0
  %794 = vmatpush1.msra.mxu0 0.0
  %795 = vmatprep.subr.mxu0 0.0
  %796 = vmatpush1.msra.mxu0 0.0
  %797 = vmatprep.subr.mxu0 0.0
  %798 = vmatpush1.msra.mxu0 0.0
  %799 = vmatprep.subr.mxu0 0.0
  %800 = vmatpush1.msra.mxu0 0.0
  %801 = vmatprep.subr.mxu0 0.0
  %802 = vmatpush1.msra.mxu0 0.0
  %803 = vmatprep.subr.mxu0 0.0
  %804 = vmatpush1.msra.mxu0 0.0
  %805 = vmatprep.subr.mxu0 0.0
  %806 = vmatpush1.msra.mxu0 0.0
  %807 = vmatprep.subr.mxu0 0.0
  %808 = vmatpush1.msra.mxu0 0.0
  %809 = vmatprep.subr.mxu0 0.0
  %810 = vmatpush1.msra.mxu0 0.0
  %811 = vmatprep.subr.mxu0 0.0
  %812 = vmatpush1.msra.mxu0 0.0
  %813 = vmatprep.subr.mxu0 0.0
  %814 = vmatpush1.msra.mxu0 0.0
  %815 = vmatprep.subr.mxu0 0.0
  %816 = vmatpush1.msra.mxu0 0.0
  %817 = vmatprep.subr.mxu0 0.0
  %818 = vmatpush1.msra.mxu0 0.0
  %819 = vmatprep.subr.mxu0 0.0
  %820 = vmatpush1.msra.mxu0 0.0
  %821 = vmatprep.subr.mxu0 0.0
  %822 = vmatpush1.msra.mxu0 0.0
  %823 = vmatprep.subr.mxu0 0.0
  %824 = vmatpush1.msra.mxu0 0.0
  %825 = vmatprep.subr.mxu0 0.0
  %826 = vmatpush1.msra.mxu0 0.0
  %827 = vmatprep.subr.mxu0 0.0
  %828 = vmatpush1.msra.mxu0 0.0
  %829 = vmatprep.mubr.f32.mxu0 0.0
  %830 = vmatmul.mubr.f32.gmra.mrb[0].mxu0 %v692
  %v831 = vpop.f32.mrb[0].mxu0
  %v832 = vadd.f32 0.0, %v831
  %v833 = vpop.f32.mrb[0].mxu0
  %834 = vdwg.mxu0
  %v835 = vmax.f32 %v761, 0.0
  %v836 = vmax.f32 %v763, 0.0
  %v837 = vmax.f32 %v832, 0.0
  %v838 = vld [vmem:[%s11] sm:$0x7]
  %v840 = vlaneseq
  %v841 = vshrl.u32 %v840, 7
  %v842 = vsub.s32 0, %v841
  %v843 = vrot.slane %v838, %v842
  %v844 = vlaneseq
  %v845 = vshrl.u32 %v844, 7
  %v846 = vsub.s32 1, %v845
  %v847 = vrot.slane %v838, %v846
  %v848 = vlaneseq
  %v849 = vshrl.u32 %v848, 7
  %v850 = vsub.s32 2, %v849
  %v851 = vrot.slane %v838, %v850
  %v855 = vmul.f32 %v835, %v843
  %v856 = vmul.f32 %v836, %v847
  %v857 = vmul.f32 %v837, %v851
  %858 = vmatprep.subr.mxu0 %v856
  %859 = vmatpush1.msra.mxu0 %v855
  %860 = vmatprep.subr.mxu0 0.0
  %861 = vmatpush1.msra.mxu0 0.0
  %862 = vmatprep.subr.mxu0 0.0
  %863 = vmatpush1.msra.mxu0 0.0
  %864 = vmatprep.subr.mxu0 0.0
  %865 = vmatpush1.msra.mxu0 0.0
  %866 = vmatprep.subr.mxu0 0.0
  %867 = vmatpush1.msra.mxu0 0.0
  %868 = vmatprep.subr.mxu0 0.0
  %869 = vmatpush1.msra.mxu0 0.0
  %870 = vmatprep.subr.mxu0 0.0
  %871 = vmatpush1.msra.mxu0 0.0
  %872 = vmatprep.subr.mxu0 0.0
  %873 = vmatpush1.msra.mxu0 0.0
  %874 = vmatprep.subr.mxu0 0.0
  %875 = vmatpush1.msra.mxu0 0.0
  %876 = vmatprep.subr.mxu0 0.0
  %877 = vmatpush1.msra.mxu0 0.0
  %878 = vmatprep.subr.mxu0 0.0
  %879 = vmatpush1.msra.mxu0 0.0
  %880 = vmatprep.subr.mxu0 0.0
  %881 = vmatpush1.msra.mxu0 0.0
  %882 = vmatprep.subr.mxu0 0.0
  %883 = vmatpush1.msra.mxu0 0.0
  %884 = vmatprep.subr.mxu0 0.0
  %885 = vmatpush1.msra.mxu0 0.0
  %886 = vmatprep.subr.mxu0 0.0
  %887 = vmatpush1.msra.mxu0 0.0
  %888 = vmatprep.subr.mxu0 0.0
  %889 = vmatpush1.msra.mxu0 0.0
  %890 = vmatprep.subr.mxu0 0.0
  %891 = vmatpush1.msra.mxu0 0.0
  %892 = vmatprep.subr.mxu0 0.0
  %893 = vmatpush1.msra.mxu0 0.0
  %894 = vmatprep.subr.mxu0 0.0
  %895 = vmatpush1.msra.mxu0 0.0
  %896 = vmatprep.subr.mxu0 0.0
  %897 = vmatpush1.msra.mxu0 0.0
  %898 = vmatprep.subr.mxu0 0.0
  %899 = vmatpush1.msra.mxu0 0.0
  %900 = vmatprep.subr.mxu0 0.0
  %901 = vmatpush1.msra.mxu0 0.0
  %902 = vmatprep.subr.mxu0 0.0
  %903 = vmatpush1.msra.mxu0 0.0
  %904 = vmatprep.subr.mxu0 0.0
  %905 = vmatpush1.msra.mxu0 0.0
  %906 = vmatprep.subr.mxu0 0.0
  %907 = vmatpush1.msra.mxu0 0.0
  %908 = vmatprep.subr.mxu0 0.0
  %909 = vmatpush1.msra.mxu0 0.0
  %910 = vmatprep.subr.mxu0 0.0
  %911 = vmatpush1.msra.mxu0 0.0
  %912 = vmatprep.subr.mxu0 0.0
  %913 = vmatpush1.msra.mxu0 0.0
  %914 = vmatprep.subr.mxu0 0.0
  %915 = vmatpush1.msra.mxu0 0.0
  %916 = vmatprep.subr.mxu0 0.0
  %917 = vmatpush1.msra.mxu0 0.0
  %918 = vmatprep.subr.mxu0 0.0
  %919 = vmatpush1.msra.mxu0 0.0
  %920 = vmatprep.subr.mxu0 0.0
  %921 = vmatpush1.msra.mxu0 0.0
  %922 = vmatprep.mubr.f32.mxu0 0.0
  %923 = vmatmul.mubr.f32.gmra.mrb[0].mxu0 %v239
  %v924 = vpop.f32.mrb[0].mxu0
  %v925 = vadd.f32 0.0, %v924
  %v926 = vpop.f32.mrb[0].mxu0
  %v927 = vadd.f32 0.0, %v926
  %928 = vdwg.mxu0
  %929 = vmatprep.subr.mxu0 0.0
  %930 = vmatpush1.msra.mxu0 %v857
  %931 = vmatprep.subr.mxu0 0.0
  %932 = vmatpush1.msra.mxu0 0.0
  %933 = vmatprep.subr.mxu0 0.0
  %934 = vmatpush1.msra.mxu0 0.0
  %935 = vmatprep.subr.mxu0 0.0
  %936 = vmatpush1.msra.mxu0 0.0
  %937 = vmatprep.subr.mxu0 0.0
  %938 = vmatpush1.msra.mxu0 0.0
  %939 = vmatprep.subr.mxu0 0.0
  %940 = vmatpush1.msra.mxu0 0.0
  %941 = vmatprep.subr.mxu0 0.0
  %942 = vmatpush1.msra.mxu0 0.0
  %943 = vmatprep.subr.mxu0 0.0
  %944 = vmatpush1.msra.mxu0 0.0
  %945 = vmatprep.subr.mxu0 0.0
  %946 = vmatpush1.msra.mxu0 0.0
  %947 = vmatprep.subr.mxu0 0.0
  %948 = vmatpush1.msra.mxu0 0.0
  %949 = vmatprep.subr.mxu0 0.0
  %950 = vmatpush1.msra.mxu0 0.0
  %951 = vmatprep.subr.mxu0 0.0
  %952 = vmatpush1.msra.mxu0 0.0
  %953 = vmatprep.subr.mxu0 0.0
  %954 = vmatpush1.msra.mxu0 0.0
  %955 = vmatprep.subr.mxu0 0.0
  %956 = vmatpush1.msra.mxu0 0.0
  %957 = vmatprep.subr.mxu0 0.0
  %958 = vmatpush1.msra.mxu0 0.0
  %959 = vmatprep.subr.mxu0 0.0
  %960 = vmatpush1.msra.mxu0 0.0
  %961 = vmatprep.subr.mxu0 0.0
  %962 = vmatpush1.msra.mxu0 0.0
  %963 = vmatprep.subr.mxu0 0.0
  %964 = vmatpush1.msra.mxu0 0.0
  %965 = vmatprep.subr.mxu0 0.0
  %966 = vmatpush1.msra.mxu0 0.0
  %967 = vmatprep.subr.mxu0 0.0
  %968 = vmatpush1.msra.mxu0 0.0
  %969 = vmatprep.subr.mxu0 0.0
  %970 = vmatpush1.msra.mxu0 0.0
  %971 = vmatprep.subr.mxu0 0.0
  %972 = vmatpush1.msra.mxu0 0.0
  %973 = vmatprep.subr.mxu0 0.0
  %974 = vmatpush1.msra.mxu0 0.0
  %975 = vmatprep.subr.mxu0 0.0
  %976 = vmatpush1.msra.mxu0 0.0
  %977 = vmatprep.subr.mxu0 0.0
  %978 = vmatpush1.msra.mxu0 0.0
  %979 = vmatprep.subr.mxu0 0.0
  %980 = vmatpush1.msra.mxu0 0.0
  %981 = vmatprep.subr.mxu0 0.0
  %982 = vmatpush1.msra.mxu0 0.0
  %983 = vmatprep.subr.mxu0 0.0
  %984 = vmatpush1.msra.mxu0 0.0
  %985 = vmatprep.subr.mxu0 0.0
  %986 = vmatpush1.msra.mxu0 0.0
  %987 = vmatprep.subr.mxu0 0.0
  %988 = vmatpush1.msra.mxu0 0.0
  %989 = vmatprep.subr.mxu0 0.0
  %990 = vmatpush1.msra.mxu0 0.0
  %991 = vmatprep.subr.mxu0 0.0
  %992 = vmatpush1.msra.mxu0 0.0
  %993 = vmatprep.mubr.f32.mxu0 0.0
  %994 = vmatmul.mubr.f32.gmra.mrb[0].mxu0 %v239
  %v995 = vpop.f32.mrb[0].mxu0
  %v996 = vadd.f32 0.0, %v995
  %v997 = vpop.f32.mrb[0].mxu0
  %998 = vdwg.mxu0
  %v999 = vadd.f32 %v925, %v927
  %vm1000 = vcmask 261120
  %v1001 = vsel %vm1000, %v996, 0.0
  %v1002 = vadd.f32 %v999, %v1001
  %1003 = vadd.xlane.f32.xlu0 %v1002
  %v1004 = vpop.xlane.xlu0 %1003
  %v1005 = vrcp.pop 512.0
  %v1006 = vmul.f32 %v1004, %v1005
  %v1007 = vsub.f32 %v835, %v1006
  %v1008 = vsub.f32 %v836, %v1006
  %v1009 = vsub.f32 %v837, %v1006
  %v1010 = vmul.f32 %v1007, %v843
  %v1011 = vmul.f32 %v1008, %v847
  %v1012 = vmul.f32 %v1009, %v851
  %v1013 = vmul.f32 %v1010, %v1010
  %v1014 = vmul.f32 %v1011, %v1011
  %v1015 = vmul.f32 %v1012, %v1012
  %1016 = vmatprep.subr.mxu0 %v1014
  %1017 = vmatpush1.msra.mxu0 %v1013
  %1018 = vmatprep.subr.mxu0 0.0
  %1019 = vmatpush1.msra.mxu0 0.0
  %1020 = vmatprep.subr.mxu0 0.0
  %1021 = vmatpush1.msra.mxu0 0.0
  %1022 = vmatprep.subr.mxu0 0.0
  %1023 = vmatpush1.msra.mxu0 0.0
  %1024 = vmatprep.subr.mxu0 0.0
  %1025 = vmatpush1.msra.mxu0 0.0
  %1026 = vmatprep.subr.mxu0 0.0
  %1027 = vmatpush1.msra.mxu0 0.0
  %1028 = vmatprep.subr.mxu0 0.0
  %1029 = vmatpush1.msra.mxu0 0.0
  %1030 = vmatprep.subr.mxu0 0.0
  %1031 = vmatpush1.msra.mxu0 0.0
  %1032 = vmatprep.subr.mxu0 0.0
  %1033 = vmatpush1.msra.mxu0 0.0
  %1034 = vmatprep.subr.mxu0 0.0
  %1035 = vmatpush1.msra.mxu0 0.0
  %1036 = vmatprep.subr.mxu0 0.0
  %1037 = vmatpush1.msra.mxu0 0.0
  %1038 = vmatprep.subr.mxu0 0.0
  %1039 = vmatpush1.msra.mxu0 0.0
  %1040 = vmatprep.subr.mxu0 0.0
  %1041 = vmatpush1.msra.mxu0 0.0
  %1042 = vmatprep.subr.mxu0 0.0
  %1043 = vmatpush1.msra.mxu0 0.0
  %1044 = vmatprep.subr.mxu0 0.0
  %1045 = vmatpush1.msra.mxu0 0.0
  %1046 = vmatprep.subr.mxu0 0.0
  %1047 = vmatpush1.msra.mxu0 0.0
  %1048 = vmatprep.subr.mxu0 0.0
  %1049 = vmatpush1.msra.mxu0 0.0
  %1050 = vmatprep.subr.mxu0 0.0
  %1051 = vmatpush1.msra.mxu0 0.0
  %1052 = vmatprep.subr.mxu0 0.0
  %1053 = vmatpush1.msra.mxu0 0.0
  %1054 = vmatprep.subr.mxu0 0.0
  %1055 = vmatpush1.msra.mxu0 0.0
  %1056 = vmatprep.subr.mxu0 0.0
  %1057 = vmatpush1.msra.mxu0 0.0
  %1058 = vmatprep.subr.mxu0 0.0
  %1059 = vmatpush1.msra.mxu0 0.0
  %1060 = vmatprep.subr.mxu0 0.0
  %1061 = vmatpush1.msra.mxu0 0.0
  %1062 = vmatprep.subr.mxu0 0.0
  %1063 = vmatpush1.msra.mxu0 0.0
  %1064 = vmatprep.subr.mxu0 0.0
  %1065 = vmatpush1.msra.mxu0 0.0
  %1066 = vmatprep.subr.mxu0 0.0
  %1067 = vmatpush1.msra.mxu0 0.0
  %1068 = vmatprep.subr.mxu0 0.0
  %1069 = vmatpush1.msra.mxu0 0.0
  %1070 = vmatprep.subr.mxu0 0.0
  %1071 = vmatpush1.msra.mxu0 0.0
  %1072 = vmatprep.subr.mxu0 0.0
  %1073 = vmatpush1.msra.mxu0 0.0
  %1074 = vmatprep.subr.mxu0 0.0
  %1075 = vmatpush1.msra.mxu0 0.0
  %1076 = vmatprep.subr.mxu0 0.0
  %1077 = vmatpush1.msra.mxu0 0.0
  %1078 = vmatprep.subr.mxu0 0.0
  %1079 = vmatpush1.msra.mxu0 0.0
  %1080 = vmatprep.mubr.f32.mxu0 0.0
  %1081 = vmatmul.mubr.f32.gmra.mrb[0].mxu0 %v239
  %v1082 = vpop.f32.mrb[0].mxu0
  %v1083 = vadd.f32 0.0, %v1082
  %v1084 = vpop.f32.mrb[0].mxu0
  %v1085 = vadd.f32 0.0, %v1084
  %1086 = vdwg.mxu0
  %1087 = vmatprep.subr.mxu0 0.0
  %1088 = vmatpush1.msra.mxu0 %v1015
  %1089 = vmatprep.subr.mxu0 0.0
  %1090 = vmatpush1.msra.mxu0 0.0
  %1091 = vmatprep.subr.mxu0 0.0
  %1092 = vmatpush1.msra.mxu0 0.0
  %1093 = vmatprep.subr.mxu0 0.0
  %1094 = vmatpush1.msra.mxu0 0.0
  %1095 = vmatprep.subr.mxu0 0.0
  %1096 = vmatpush1.msra.mxu0 0.0
  %1097 = vmatprep.subr.mxu0 0.0
  %1098 = vmatpush1.msra.mxu0 0.0
  %1099 = vmatprep.subr.mxu0 0.0
  %1100 = vmatpush1.msra.mxu0 0.0
  %1101 = vmatprep.subr.mxu0 0.0
  %1102 = vmatpush1.msra.mxu0 0.0
  %1103 = vmatprep.subr.mxu0 0.0
  %1104 = vmatpush1.msra.mxu0 0.0
  %1105 = vmatprep.subr.mxu0 0.0
  %1106 = vmatpush1.msra.mxu0 0.0
  %1107 = vmatprep.subr.mxu0 0.0
  %1108 = vmatpush1.msra.mxu0 0.0
  %1109 = vmatprep.subr.mxu0 0.0
  %1110 = vmatpush1.msra.mxu0 0.0
  %1111 = vmatprep.subr.mxu0 0.0
  %1112 = vmatpush1.msra.mxu0 0.0
  %1113 = vmatprep.subr.mxu0 0.0
  %1114 = vmatpush1.msra.mxu0 0.0
  %1115 = vmatprep.subr.mxu0 0.0
  %1116 = vmatpush1.msra.mxu0 0.0
  %1117 = vmatprep.subr.mxu0 0.0
  %1118 = vmatpush1.msra.mxu0 0.0
  %1119 = vmatprep.subr.mxu0 0.0
  %1120 = vmatpush1.msra.mxu0 0.0
  %1121 = vmatprep.subr.mxu0 0.0
  %1122 = vmatpush1.msra.mxu0 0.0
  %1123 = vmatprep.subr.mxu0 0.0
  %1124 = vmatpush1.msra.mxu0 0.0
  %1125 = vmatprep.subr.mxu0 0.0
  %1126 = vmatpush1.msra.mxu0 0.0
  %1127 = vmatprep.subr.mxu0 0.0
  %1128 = vmatpush1.msra.mxu0 0.0
  %1129 = vmatprep.subr.mxu0 0.0
  %1130 = vmatpush1.msra.mxu0 0.0
  %1131 = vmatprep.subr.mxu0 0.0
  %1132 = vmatpush1.msra.mxu0 0.0
  %1133 = vmatprep.subr.mxu0 0.0
  %1134 = vmatpush1.msra.mxu0 0.0
  %1135 = vmatprep.subr.mxu0 0.0
  %1136 = vmatpush1.msra.mxu0 0.0
  %1137 = vmatprep.subr.mxu0 0.0
  %1138 = vmatpush1.msra.mxu0 0.0
  %1139 = vmatprep.subr.mxu0 0.0
  %1140 = vmatpush1.msra.mxu0 0.0
  %1141 = vmatprep.subr.mxu0 0.0
  %1142 = vmatpush1.msra.mxu0 0.0
  %1143 = vmatprep.subr.mxu0 0.0
  %1144 = vmatpush1.msra.mxu0 0.0
  %1145 = vmatprep.subr.mxu0 0.0
  %1146 = vmatpush1.msra.mxu0 0.0
  %1147 = vmatprep.subr.mxu0 0.0
  %1148 = vmatpush1.msra.mxu0 0.0
  %1149 = vmatprep.subr.mxu0 0.0
  %1150 = vmatpush1.msra.mxu0 0.0
  %1151 = vmatprep.mubr.f32.mxu0 0.0
  %1152 = vmatmul.mubr.f32.gmra.mrb[0].mxu0 %v239
  %v1153 = vpop.f32.mrb[0].mxu0
  %v1154 = vadd.f32 0.0, %v1153
  %v1155 = vpop.f32.mrb[0].mxu0
  %1156 = vdwg.mxu0
  %v1157 = vadd.f32 %v1083, %v1085
  %v1158 = vsel %vm1000, %v1154, 0.0
  %v1159 = vadd.f32 %v1157, %v1158
  %1160 = vadd.xlane.f32.xlu0 %v1159
  %v1161 = vpop.xlane.xlu0 %1160
  %v1162 = vmul.f32 %v1161, %v1005
  %v1163 = vadd.f32 %v1162, 1e-05
  %v1164 = vrsqrt.pop %v1163
  %v1165 = vmul.f32 %v1007, %v1164
  %v1166 = vmul.f32 %v1008, %v1164
  %v1167 = vmul.f32 %v1009, %v1164
  %v1168 = vld [vmem:[%s9] sm:$0xff]
  %1170 = vset.pattern.permute.xlu0 0
  %1171 = vperm.xlu0 %1170, %v1168
  %v1172 = vpop.permute.xlu0 %1171
  %v1174 = vmul.f32 %v1165, %v1172
  %v1175 = vmul.f32 %v1166, %v1172
  %v1176 = vmul.f32 %v1167, %v1172
  %v1177 = vld [vmem:[%s10] sm:$0xff]
  %1179 = vset.pattern.permute.xlu0 0
  %1180 = vperm.xlu0 %1179, %v1177
  %v1181 = vpop.permute.xlu0 %1180
  %v1183 = vadd.f32 %v1174, %v1181
  %v1184 = vadd.f32 %v1175, %v1181
  %v1185 = vadd.f32 %v1176, %v1181
  %v1186 = vld [vmem:[%s12] sm:$0x3f]
  %v1188 = vsel %vm237, %v1186, 0
  %1190 = vmatprep.subr.mxu0 %v1184
  %1191 = vmatpush1.msra.mxu0 %v1183
  %1192 = vmatprep.subr.mxu0 0.0
  %1193 = vmatpush1.msra.mxu0 0.0
  %1194 = vmatprep.subr.mxu0 0.0
  %1195 = vmatpush1.msra.mxu0 0.0
  %1196 = vmatprep.subr.mxu0 0.0
  %1197 = vmatpush1.msra.mxu0 0.0
  %1198 = vmatprep.subr.mxu0 0.0
  %1199 = vmatpush1.msra.mxu0 0.0
  %1200 = vmatprep.subr.mxu0 0.0
  %1201 = vmatpush1.msra.mxu0 0.0
  %1202 = vmatprep.subr.mxu0 0.0
  %1203 = vmatpush1.msra.mxu0 0.0
  %1204 = vmatprep.subr.mxu0 0.0
  %1205 = vmatpush1.msra.mxu0 0.0
  %1206 = vmatprep.subr.mxu0 0.0
  %1207 = vmatpush1.msra.mxu0 0.0
  %1208 = vmatprep.subr.mxu0 0.0
  %1209 = vmatpush1.msra.mxu0 0.0
  %1210 = vmatprep.subr.mxu0 0.0
  %1211 = vmatpush1.msra.mxu0 0.0
  %1212 = vmatprep.subr.mxu0 0.0
  %1213 = vmatpush1.msra.mxu0 0.0
  %1214 = vmatprep.subr.mxu0 0.0
  %1215 = vmatpush1.msra.mxu0 0.0
  %1216 = vmatprep.subr.mxu0 0.0
  %1217 = vmatpush1.msra.mxu0 0.0
  %1218 = vmatprep.subr.mxu0 0.0
  %1219 = vmatpush1.msra.mxu0 0.0
  %1220 = vmatprep.subr.mxu0 0.0
  %1221 = vmatpush1.msra.mxu0 0.0
  %1222 = vmatprep.subr.mxu0 0.0
  %1223 = vmatpush1.msra.mxu0 0.0
  %1224 = vmatprep.subr.mxu0 0.0
  %1225 = vmatpush1.msra.mxu0 0.0
  %1226 = vmatprep.subr.mxu0 0.0
  %1227 = vmatpush1.msra.mxu0 0.0
  %1228 = vmatprep.subr.mxu0 0.0
  %1229 = vmatpush1.msra.mxu0 0.0
  %1230 = vmatprep.subr.mxu0 0.0
  %1231 = vmatpush1.msra.mxu0 0.0
  %1232 = vmatprep.subr.mxu0 0.0
  %1233 = vmatpush1.msra.mxu0 0.0
  %1234 = vmatprep.subr.mxu0 0.0
  %1235 = vmatpush1.msra.mxu0 0.0
  %1236 = vmatprep.subr.mxu0 0.0
  %1237 = vmatpush1.msra.mxu0 0.0
  %1238 = vmatprep.subr.mxu0 0.0
  %1239 = vmatpush1.msra.mxu0 0.0
  %1240 = vmatprep.subr.mxu0 0.0
  %1241 = vmatpush1.msra.mxu0 0.0
  %1242 = vmatprep.subr.mxu0 0.0
  %1243 = vmatpush1.msra.mxu0 0.0
  %1244 = vmatprep.subr.mxu0 0.0
  %1245 = vmatpush1.msra.mxu0 0.0
  %1246 = vmatprep.subr.mxu0 0.0
  %1247 = vmatpush1.msra.mxu0 0.0
  %1248 = vmatprep.subr.mxu0 0.0
  %1249 = vmatpush1.msra.mxu0 0.0
  %1250 = vmatprep.subr.mxu0 0.0
  %1251 = vmatpush1.msra.mxu0 0.0
  %1252 = vmatprep.subr.mxu0 0.0
  %1253 = vmatpush1.msra.mxu0 0.0
  %1254 = vmatprep.mubr.f32.mxu0 0.0
  %1255 = vmatmul.mubr.f32.gmra.mrb[0].mxu0 %v1188
  %v1256 = vpop.f32.mrb[0].mxu0
  %v1257 = vadd.f32 0.0, %v1256
  %v1258 = vpop.f32.mrb[0].mxu0
  %v1259 = vadd.f32 0.0, %v1258
  %1260 = vdwg.mxu0
  %1261 = vmatprep.subr.mxu0 0.0
  %1262 = vmatpush1.msra.mxu0 %v1185
  %1263 = vmatprep.subr.mxu0 0.0
  %1264 = vmatpush1.msra.mxu0 0.0
  %1265 = vmatprep.subr.mxu0 0.0
  %1266 = vmatpush1.msra.mxu0 0.0
  %1267 = vmatprep.subr.mxu0 0.0
  %1268 = vmatpush1.msra.mxu0 0.0
  %1269 = vmatprep.subr.mxu0 0.0
  %1270 = vmatpush1.msra.mxu0 0.0
  %1271 = vmatprep.subr.mxu0 0.0
  %1272 = vmatpush1.msra.mxu0 0.0
  %1273 = vmatprep.subr.mxu0 0.0
  %1274 = vmatpush1.msra.mxu0 0.0
  %1275 = vmatprep.subr.mxu0 0.0
  %1276 = vmatpush1.msra.mxu0 0.0
  %1277 = vmatprep.subr.mxu0 0.0
  %1278 = vmatpush1.msra.mxu0 0.0
  %1279 = vmatprep.subr.mxu0 0.0
  %1280 = vmatpush1.msra.mxu0 0.0
  %1281 = vmatprep.subr.mxu0 0.0
  %1282 = vmatpush1.msra.mxu0 0.0
  %1283 = vmatprep.subr.mxu0 0.0
  %1284 = vmatpush1.msra.mxu0 0.0
  %1285 = vmatprep.subr.mxu0 0.0
  %1286 = vmatpush1.msra.mxu0 0.0
  %1287 = vmatprep.subr.mxu0 0.0
  %1288 = vmatpush1.msra.mxu0 0.0
  %1289 = vmatprep.subr.mxu0 0.0
  %1290 = vmatpush1.msra.mxu0 0.0
  %1291 = vmatprep.subr.mxu0 0.0
  %1292 = vmatpush1.msra.mxu0 0.0
  %1293 = vmatprep.subr.mxu0 0.0
  %1294 = vmatpush1.msra.mxu0 0.0
  %1295 = vmatprep.subr.mxu0 0.0
  %1296 = vmatpush1.msra.mxu0 0.0
  %1297 = vmatprep.subr.mxu0 0.0
  %1298 = vmatpush1.msra.mxu0 0.0
  %1299 = vmatprep.subr.mxu0 0.0
  %1300 = vmatpush1.msra.mxu0 0.0
  %1301 = vmatprep.subr.mxu0 0.0
  %1302 = vmatpush1.msra.mxu0 0.0
  %1303 = vmatprep.subr.mxu0 0.0
  %1304 = vmatpush1.msra.mxu0 0.0
  %1305 = vmatprep.subr.mxu0 0.0
  %1306 = vmatpush1.msra.mxu0 0.0
  %1307 = vmatprep.subr.mxu0 0.0
  %1308 = vmatpush1.msra.mxu0 0.0
  %1309 = vmatprep.subr.mxu0 0.0
  %1310 = vmatpush1.msra.mxu0 0.0
  %1311 = vmatprep.subr.mxu0 0.0
  %1312 = vmatpush1.msra.mxu0 0.0
  %1313 = vmatprep.subr.mxu0 0.0
  %1314 = vmatpush1.msra.mxu0 0.0
  %1315 = vmatprep.subr.mxu0 0.0
  %1316 = vmatpush1.msra.mxu0 0.0
  %1317 = vmatprep.subr.mxu0 0.0
  %1318 = vmatpush1.msra.mxu0 0.0
  %1319 = vmatprep.subr.mxu0 0.0
  %1320 = vmatpush1.msra.mxu0 0.0
  %1321 = vmatprep.subr.mxu0 0.0
  %1322 = vmatpush1.msra.mxu0 0.0
  %1323 = vmatprep.subr.mxu0 0.0
  %1324 = vmatpush1.msra.mxu0 0.0
  %1325 = vmatprep.mubr.f32.mxu0 0.0
  %1326 = vmatmul.mubr.f32.gmra.mrb[0].mxu0 %v1188
  %v1327 = vpop.f32.mrb[0].mxu0
  %v1328 = vadd.f32 0.0, %v1327
  %v1329 = vpop.f32.mrb[0].mxu0
  %1330 = vdwg.mxu0
  %v1331 = vld [vmem:[%s13] sm:$0xff]
  %v1332 = vld [vmem:[%s13 + $0x8] sm:$0xff]
  %v1333 = vld [vmem:[%s13 + $0x10] sm:$0xff]
  %v1334 = vld [vmem:[%s13 + $0x18] sm:$0xff]
  %v1335 = vld [vmem:[%s13 + $0x20] sm:$0xff]
  %v1336 = vld [vmem:[%s13 + $0x28] sm:$0xff]
  %v1337 = vld [vmem:[%s13 + $0x30] sm:$0xff]
  %v1338 = vld [vmem:[%s13 + $0x38] sm:$0xff]
  %v1339 = vld [vmem:[%s13 + $0x40] sm:$0xff]
  %v1340 = vld [vmem:[%s13 + $0x48] sm:$0xff]
  %v1341 = vld [vmem:[%s13 + $0x50] sm:$0xff]
  %v1342 = vld [vmem:[%s13 + $0x58] sm:$0xff]
  %v1343 = vld [vmem:[%s13 + $0x60] sm:$0xff]
  %v1344 = vld [vmem:[%s13 + $0x68] sm:$0xff]
  %v1345 = vld [vmem:[%s13 + $0x70] sm:$0xff]
  %v1346 = vld [vmem:[%s13 + $0x78] sm:$0xff]
  %v1347 = vld [vmem:[%s13 + $0x80] sm:$0xff]
  %v1348 = vld [vmem:[%s13 + $0x88] sm:$0xff]
  %v1349 = vld [vmem:[%s13 + $0x90] sm:$0xff]
  %v1350 = vld [vmem:[%s13 + $0x98] sm:$0xff]
  %v1351 = vld [vmem:[%s13 + $0xa0] sm:$0xff]
  %v1352 = vld [vmem:[%s13 + $0xa8] sm:$0xff]
  %v1353 = vld [vmem:[%s13 + $0xb0] sm:$0xff]
  %v1354 = vld [vmem:[%s13 + $0xb8] sm:$0xff]
  %v1355 = vld [vmem:[%s13 + $0xc0] sm:$0xff]
  %v1356 = vld [vmem:[%s13 + $0xc8] sm:$0xff]
  %v1357 = vld [vmem:[%s13 + $0xd0] sm:$0xff]
  %v1358 = vld [vmem:[%s13 + $0xd8] sm:$0xff]
  %v1359 = vld [vmem:[%s13 + $0xe0] sm:$0xff]
  %v1360 = vld [vmem:[%s13 + $0xe8] sm:$0xff]
  %v1361 = vld [vmem:[%s13 + $0xf0] sm:$0xff]
  %v1362 = vld [vmem:[%s13 + $0xf8] sm:$0xff]
  %v1363 = vld [vmem:[%s13 + $0x100] sm:$0xff]
  %v1364 = vld [vmem:[%s13 + $0x108] sm:$0xff]
  %v1365 = vld [vmem:[%s13 + $0x110] sm:$0xff]
  %v1366 = vld [vmem:[%s13 + $0x118] sm:$0xff]
  %v1367 = vld [vmem:[%s13 + $0x120] sm:$0xff]
  %v1368 = vld [vmem:[%s13 + $0x128] sm:$0xff]
  %v1369 = vld [vmem:[%s13 + $0x130] sm:$0xff]
  %v1370 = vld [vmem:[%s13 + $0x138] sm:$0xff]
  %v1371 = vld [vmem:[%s13 + $0x140] sm:$0xff]
  %v1372 = vld [vmem:[%s13 + $0x148] sm:$0xff]
  %v1373 = vld [vmem:[%s13 + $0x150] sm:$0xff]
  %v1374 = vld [vmem:[%s13 + $0x158] sm:$0xff]
  %v1375 = vld [vmem:[%s13 + $0x160] sm:$0xff]
  %v1376 = vld [vmem:[%s13 + $0x168] sm:$0xff]
  %v1377 = vld [vmem:[%s13 + $0x170] sm:$0xff]
  %v1378 = vld [vmem:[%s13 + $0x178] sm:$0xff]
  %v1379 = vld [vmem:[%s13 + $0x180] sm:$0xff]
  %v1380 = vld [vmem:[%s13 + $0x188] sm:$0xff]
  %v1381 = vld [vmem:[%s13 + $0x190] sm:$0xff]
  %v1382 = vld [vmem:[%s13 + $0x198] sm:$0xff]
  %v1383 = vld [vmem:[%s13 + $0x1a0] sm:$0xff]
  %v1384 = vld [vmem:[%s13 + $0x1a8] sm:$0xff]
  %v1385 = vld [vmem:[%s13 + $0x1b0] sm:$0xff]
  %v1386 = vld [vmem:[%s13 + $0x1b8] sm:$0xff]
  %v1387 = vld [vmem:[%s13 + $0x1c0] sm:$0xff]
  %v1388 = vld [vmem:[%s13 + $0x1c8] sm:$0xff]
  %v1389 = vld [vmem:[%s13 + $0x1d0] sm:$0xff]
  %v1390 = vld [vmem:[%s13 + $0x1d8] sm:$0xff]
  %v1391 = vld [vmem:[%s13 + $0x1e0] sm:$0xff]
  %v1392 = vld [vmem:[%s13 + $0x1e8] sm:$0xff]
  %v1393 = vld [vmem:[%s13 + $0x1f0] sm:$0xff]
  %v1394 = vld [vmem:[%s13 + $0x1f8] sm:$0xff]
  %v1395 = vld [vmem:[%s13 + $0x200] sm:$0xff]
  %v1396 = vld [vmem:[%s13 + $0x208] sm:$0xff]
  %v1397 = vld [vmem:[%s13 + $0x210] sm:$0xff]
  %v1398 = vld [vmem:[%s13 + $0x218] sm:$0xff]
  %v1399 = vld [vmem:[%s13 + $0x220] sm:$0xff]
  %v1400 = vld [vmem:[%s13 + $0x228] sm:$0xff]
  %v1401 = vld [vmem:[%s13 + $0x230] sm:$0xff]
  %v1402 = vld [vmem:[%s13 + $0x238] sm:$0xff]
  %v1404 = vsel %vm1000, %v1328, 0
  %1406 = vmatprep.subr.mxu0 %v1332
  %1407 = vmatpush1.msra.mxu0 %v1331
  %1408 = vmatprep.subr.mxu0 %v1334
  %1409 = vmatpush1.msra.mxu0 %v1333
  %1410 = vmatprep.subr.mxu0 %v1336
  %1411 = vmatpush1.msra.mxu0 %v1335
  %1412 = vmatprep.subr.mxu0 %v1338
  %1413 = vmatpush1.msra.mxu0 %v1337
  %1414 = vmatprep.subr.mxu0 %v1340
  %1415 = vmatpush1.msra.mxu0 %v1339
  %1416 = vmatprep.subr.mxu0 %v1342
  %1417 = vmatpush1.msra.mxu0 %v1341
  %1418 = vmatprep.subr.mxu0 %v1344
  %1419 = vmatpush1.msra.mxu0 %v1343
  %1420 = vmatprep.subr.mxu0 %v1346
  %1421 = vmatpush1.msra.mxu0 %v1345
  %1422 = vmatprep.subr.mxu0 %v1348
  %1423 = vmatpush1.msra.mxu0 %v1347
  %1424 = vmatprep.subr.mxu0 %v1350
  %1425 = vmatpush1.msra.mxu0 %v1349
  %1426 = vmatprep.subr.mxu0 %v1352
  %1427 = vmatpush1.msra.mxu0 %v1351
  %1428 = vmatprep.subr.mxu0 %v1354
  %1429 = vmatpush1.msra.mxu0 %v1353
  %1430 = vmatprep.subr.mxu0 %v1356
  %1431 = vmatpush1.msra.mxu0 %v1355
  %1432 = vmatprep.subr.mxu0 %v1358
  %1433 = vmatpush1.msra.mxu0 %v1357
  %1434 = vmatprep.subr.mxu0 %v1360
  %1435 = vmatpush1.msra.mxu0 %v1359
  %1436 = vmatprep.subr.mxu0 %v1362
  %1437 = vmatpush1.msra.mxu0 %v1361
  %1438 = vmatprep.subr.mxu0 %v1364
  %1439 = vmatpush1.msra.mxu0 %v1363
  %1440 = vmatprep.subr.mxu0 %v1366
  %1441 = vmatpush1.msra.mxu0 %v1365
  %1442 = vmatprep.subr.mxu0 %v1368
  %1443 = vmatpush1.msra.mxu0 %v1367
  %1444 = vmatprep.subr.mxu0 %v1370
  %1445 = vmatpush1.msra.mxu0 %v1369
  %1446 = vmatprep.subr.mxu0 %v1372
  %1447 = vmatpush1.msra.mxu0 %v1371
  %1448 = vmatprep.subr.mxu0 %v1374
  %1449 = vmatpush1.msra.mxu0 %v1373
  %1450 = vmatprep.subr.mxu0 %v1376
  %1451 = vmatpush1.msra.mxu0 %v1375
  %1452 = vmatprep.subr.mxu0 %v1378
  %1453 = vmatpush1.msra.mxu0 %v1377
  %1454 = vmatprep.subr.mxu0 %v1380
  %1455 = vmatpush1.msra.mxu0 %v1379
  %1456 = vmatprep.subr.mxu0 %v1382
  %1457 = vmatpush1.msra.mxu0 %v1381
  %1458 = vmatprep.subr.mxu0 %v1384
  %1459 = vmatpush1.msra.mxu0 %v1383
  %1460 = vmatprep.subr.mxu0 %v1386
  %1461 = vmatpush1.msra.mxu0 %v1385
  %1462 = vmatprep.subr.mxu0 %v1388
  %1463 = vmatpush1.msra.mxu0 %v1387
  %1464 = vmatprep.subr.mxu0 %v1390
  %1465 = vmatpush1.msra.mxu0 %v1389
  %1466 = vmatprep.subr.mxu0 %v1392
  %1467 = vmatpush1.msra.mxu0 %v1391
  %1468 = vmatprep.subr.mxu0 %v1394
  %1469 = vmatpush1.msra.mxu0 %v1393
  %1470 = vmatprep.mubr.f32.mxu0 %v1259
  %1471 = vmatmul.mubr.f32.gmra.mrb[0].mxu0 %v1257
  %v1472 = vpop.f32.mrb[0].mxu0
  %v1473 = vadd.f32 0.0, %v1472
  %v1474 = vpop.f32.mrb[0].mxu0
  %v1475 = vadd.f32 0.0, %v1474
  %1476 = vdwg.mxu0
  %1477 = vmatprep.subr.mxu0 %v1396
  %1478 = vmatpush1.msra.mxu0 %v1395
  %1479 = vmatprep.subr.mxu0 %v1398
  %1480 = vmatpush1.msra.mxu0 %v1397
  %1481 = vmatprep.subr.mxu0 %v1400
  %1482 = vmatpush1.msra.mxu0 %v1399
  %1483 = vmatprep.subr.mxu0 %v1402
  %1484 = vmatpush1.msra.mxu0 %v1401
  %1485 = vmatprep.subr.mxu0 0.0
  %1486 = vmatpush1.msra.mxu0 0.0
  %1487 = vmatprep.subr.mxu0 0.0
  %1488 = vmatpush1.msra.mxu0 0.0
  %1489 = vmatprep.subr.mxu0 0.0
  %1490 = vmatpush1.msra.mxu0 0.0
  %1491 = vmatprep.subr.mxu0 0.0
  %1492 = vmatpush1.msra.mxu0 0.0
  %1493 = vmatprep.subr.mxu0 0.0
  %1494 = vmatpush1.msra.mxu0 0.0
  %1495 = vmatprep.subr.mxu0 0.0
  %1496 = vmatpush1.msra.mxu0 0.0
  %1497 = vmatprep.subr.mxu0 0.0
  %1498 = vmatpush1.msra.mxu0 0.0
  %1499 = vmatprep.subr.mxu0 0.0
  %1500 = vmatpush1.msra.mxu0 0.0
  %1501 = vmatprep.subr.mxu0 0.0
  %1502 = vmatpush1.msra.mxu0 0.0
  %1503 = vmatprep.subr.mxu0 0.0
  %1504 = vmatpush1.msra.mxu0 0.0
  %1505 = vmatprep.subr.mxu0 0.0
  %1506 = vmatpush1.msra.mxu0 0.0
  %1507 = vmatprep.subr.mxu0 0.0
  %1508 = vmatpush1.msra.mxu0 0.0
  %1509 = vmatprep.subr.mxu0 0.0
  %1510 = vmatpush1.msra.mxu0 0.0
  %1511 = vmatprep.subr.mxu0 0.0
  %1512 = vmatpush1.msra.mxu0 0.0
  %1513 = vmatprep.subr.mxu0 0.0
  %1514 = vmatpush1.msra.mxu0 0.0
  %1515 = vmatprep.subr.mxu0 0.0
  %1516 = vmatpush1.msra.mxu0 0.0
  %1517 = vmatprep.subr.mxu0 0.0
  %1518 = vmatpush1.msra.mxu0 0.0
  %1519 = vmatprep.subr.mxu0 0.0
  %1520 = vmatpush1.msra.mxu0 0.0
  %1521 = vmatprep.subr.mxu0 0.0
  %1522 = vmatpush1.msra.mxu0 0.0
  %1523 = vmatprep.subr.mxu0 0.0
  %1524 = vmatpush1.msra.mxu0 0.0
  %1525 = vmatprep.subr.mxu0 0.0
  %1526 = vmatpush1.msra.mxu0 0.0
  %1527 = vmatprep.subr.mxu0 0.0
  %1528 = vmatpush1.msra.mxu0 0.0
  %1529 = vmatprep.subr.mxu0 0.0
  %1530 = vmatpush1.msra.mxu0 0.0
  %1531 = vmatprep.subr.mxu0 0.0
  %1532 = vmatpush1.msra.mxu0 0.0
  %1533 = vmatprep.subr.mxu0 0.0
  %1534 = vmatpush1.msra.mxu0 0.0
  %1535 = vmatprep.subr.mxu0 0.0
  %1536 = vmatpush1.msra.mxu0 0.0
  %1537 = vmatprep.subr.mxu0 0.0
  %1538 = vmatpush1.msra.mxu0 0.0
  %1539 = vmatprep.subr.mxu0 0.0
  %1540 = vmatpush1.msra.mxu0 0.0
  %1541 = vmatprep.mubr.f32.mxu0 0.0
  %1542 = vmatmul.mubr.f32.gmra.mrb[0].mxu0 %v1404
  %v1543 = vpop.f32.mrb[0].mxu0
  %v1544 = vadd.f32 %v1473, %v1543
  %v1545 = vpop.f32.mrb[0].mxu0
  %v1546 = vadd.f32 %v1475, %v1545
  %1547 = vdwg.mxu0
  %1548 = vst [vmem:[%s14] sm:$0x3f] %v1544
  %1549 = vst [vmem:[%s14 + $0x8] sm:$0x3f] %v1546
  // Predicated region
  $region58: #{_forward.1} parent=0 // pred_check
    _
  $region59: #{_forward.1} parent=0 // pred_check_branch
    %1551 = sbr.rel (0) target = $region61
  $region60: #{_forward.1} parent=0 // pred_region
    _
  $region61: #{_forward.1} parent=0 // pred_fallthru
    _
  // Predicated region
  $region62: #{_forward.1} parent=0 // pred_check
    _
  $region63: #{_forward.1} parent=0 // pred_check_branch
    %1553 = sbr.rel (0) target = $region65
  $region64: #{_forward.1} parent=0 // pred_region
    _
  $region65: #{_forward.1} parent=0 // pred_fallthru
    _

</llo_original>
